<compile_context>
chip_gen: v6e
topology: v6e:2x2x1
jax: 0.10.0
libtpu: 0.0.40
codegen_flags: <defaults>
</compile_context>

<pallas_src>
import functools

import jax
import jax.numpy as jnp
import numpy as np
from jax import lax
from jax.experimental import pallas as pl
from jax.experimental.pallas import tpu as pltpu

BN_EPS = 1e-5
_VMEM_LIMIT_BYTES = 32 * 1024 * 1024  # explicit, safe headroom on v5e/v6e/v7x


def _pick_row_tile(Ho, Wo, max_lanes=1024):
    """Largest row tile Th dividing Ho whose flattened tile Th*Wo is lane-dense
    (a multiple of 128) and at most `max_lanes` lanes (kept modest so the same
    tile also fits v7x's smaller VMEM).  Falls back to the full height (a
    full-dim block needs no 128-padding)."""
    best = None
    for Th in range(1, Ho + 1):
        if Ho % Th:
            continue
        lanes = Th * Wo
        if lanes % 128 == 0 and lanes <= max_lanes:
            best = Th
    return best if best is not None else Ho


def _make_conv_kernel(k, stride, Cin, Cout, Th, Wo):
    """Conv kernel for one (batch, row-tile) grid step."""
    KK = k * k * Cin           # folded contraction length
    L = Th * Wo                # lane-dense tile width
    s = stride
    col_span = (Wo - 1) * s + 1
    row_span = (Th - 1) * s + k

    def kernel(x_ref, w_ref, conv_ref, mom_ref, p_scr):
        # x_ref   : (Hp, Cin, Wp)  zero-padded input image of this batch element
        # w_ref   : (Cout, KK)     folded conv weights (resident across grid)
        # conv_ref: (Cout, L)      conv output tile (f32, lane-dense)
        # mom_ref : (Cout, 2)      per-tile [sum, sum-of-squares] for BatchNorm
        # p_scr   : (KK, L)        VMEM im2col patch buffer for this tile
        r = pl.program_id(1)
        row0 = pl.multiple_of(r * (Th * s), Th * s)  # first padded input row

        # Load each needed padded input row once: (Cin, Wp) per row.
        lines = [x_ref[row0 + d] for d in range(row_span)]

        # Build the im2col patch matrix for this tile entirely inside VMEM:
        #   p_scr[(ky*k + kx)*Cin + c, i*Wo + j] = x_pad[row0 + i*s + ky, c, kx + j*s]
        for i in range(Th):                      # output rows of the tile
            for ky in range(k):
                line = lines[i * s + ky]                       # (Cin, Wp)
                for kx in range(k):
                    tap = ky * k + kx
                    cols = line[:, kx:kx + col_span:s]         # (Cin, Wo)
                    p_scr[tap * Cin:(tap + 1) * Cin,
                          i * Wo:(i + 1) * Wo] = cols

        # Single folded-tap MXU matmul: (Cout, KK) x (KK, L) -> (Cout, L), f32 acc.
        acc = jnp.dot(w_ref[...], p_scr[...],
                      preferred_element_type=jnp.float32)
        conv_ref[...] = acc

        # Per-tile partial BatchNorm moments (f32), lane reduction on the XLU.
        mom_ref[:, 0:1] = jnp.sum(acc, axis=1, keepdims=True)
        mom_ref[:, 1:2] = jnp.sum(acc * acc, axis=1, keepdims=True)

    return kernel


def _bn_relu_kernel(conv_ref, scale_ref, shift_ref, o_ref):
    """Apply precomputed BatchNorm scale/shift + ReLU to one lane-dense tile."""
    # conv_ref: (Cout, L) f32, scale/shift: (Cout, 1) f32, o_ref: (Cout, L)
    y = conv_ref[...] * scale_ref[...] + shift_ref[...]
    o_ref[...] = jnp.maximum(y, 0.0).astype(o_ref.dtype)


@functools.partial(jax.jit, static_argnames=("stride", "row_tile", "compute_dtype"))
def convolution_forward(x_nchw, weight_oihw, gamma, beta, *, stride=1,
                        row_tile=None, compute_dtype=jnp.float32):
    """Forward pass of `convolution` (Conv2d no-bias + BatchNorm2d(train) + ReLU).

    x_nchw:      (N, Cin, H, W)
    weight_oihw: (Cout, Cin, k, k)
    gamma, beta: (Cout,)
    returns:     (N, Cout, Ho, Wo)
    """
    N, Cin, H, W = x_nchw.shape
    Cout, _, k, _ = weight_oihw.shape
    pad = (k - 1) // 2
    s = stride
    Ho = (H + 2 * pad - k) // s + 1
    Wo = (W + 2 * pad - k) // s + 1
    Hp, Wp = H + 2 * pad, W + 2 * pad

    Th = _pick_row_tile(Ho, Wo) if row_tile is None else row_tile
    if Ho % Th != 0:
        raise ValueError(f"row_tile={Th} must divide Ho={Ho}")
    R = Ho // Th                 # number of row tiles per image
    L = Th * Wo                  # lane width of one tile
    KK = k * k * Cin

    # --- HBM-side glue: one pass over the input, no k^2 im2col blow-up. ---
    # Padded input laid out (N, Hp, Cin, Wp) so the kernel fetches one spatial
    # row (Cin, Wp) with a dynamic first-axis index.
    x_pad = jnp.pad(x_nchw, ((0, 0), (0, 0), (pad, pad), (pad, pad)))
    x_pad = jnp.transpose(x_pad, (0, 2, 1, 3)).astype(compute_dtype)   # (N,Hp,Cin,Wp)
    # Folded weights (Cout, k*k*Cin), tap-major / channel-minor.
    w2 = jnp.transpose(weight_oihw, (0, 2, 3, 1)).reshape(Cout, KK)
    w2 = w2.astype(compute_dtype)

    conv_kernel = _make_conv_kernel(k, s, Cin, Cout, Th, Wo)
    conv, mom = pl.pallas_call(
        conv_kernel,
        out_shape=(
            jax.ShapeDtypeStruct((N, Cout, Ho * Wo), jnp.float32),  # pre-BN conv
            jax.ShapeDtypeStruct((N, R, Cout, 2), jnp.float32),     # tile moments
        ),
        grid_spec=pltpu.PrefetchScalarGridSpec(
            num_scalar_prefetch=0,
            grid=(N, R),
            in_specs=[
                pl.BlockSpec((None, Hp, Cin, Wp), lambda n, r: (n, 0, 0, 0)),
                pl.BlockSpec((Cout, KK), lambda n, r: (0, 0)),
            ],
            out_specs=[
                pl.BlockSpec((None, Cout, L), lambda n, r: (n, 0, r)),
                pl.BlockSpec((None, None, Cout, 2), lambda n, r: (n, r, 0, 0)),
            ],
            scratch_shapes=[pltpu.VMEM((KK, L), compute_dtype)],
        ),
        compiler_params=pltpu.CompilerParams(
            dimension_semantics=("parallel", "parallel"),
            vmem_limit_bytes=_VMEM_LIMIT_BYTES,
        ),
    )(x_pad, w2)

    # --- finish BatchNorm statistics in f32 (tiny: O(N*R*Cout) elements). ---
    m_total = float(N * Ho * Wo)
    sums = jnp.sum(mom[..., 0], axis=(0, 1))
    sumsq = jnp.sum(mom[..., 1], axis=(0, 1))
    mean = sums / m_total
    var = jnp.maximum(sumsq / m_total - mean * mean, 0.0)   # biased batch variance
    scale = gamma.astype(jnp.float32) * lax.rsqrt(var + BN_EPS)
    shift = beta.astype(jnp.float32) - mean * scale
    scale2 = scale.reshape(Cout, 1)
    shift2 = shift.reshape(Cout, 1)

    # --- pass 2: apply BN scale/shift + ReLU tile-wise (lane-dense). ---
    y = pl.pallas_call(
        _bn_relu_kernel,
        out_shape=jax.ShapeDtypeStruct((N, Cout, Ho * Wo), x_nchw.dtype),
        grid_spec=pltpu.PrefetchScalarGridSpec(
            num_scalar_prefetch=0,
            grid=(N, R),
            in_specs=[
                pl.BlockSpec((None, Cout, L), lambda n, r: (n, 0, r)),
                pl.BlockSpec((Cout, 1), lambda n, r: (0, 0)),
                pl.BlockSpec((Cout, 1), lambda n, r: (0, 0)),
            ],
            out_specs=pl.BlockSpec((None, Cout, L), lambda n, r: (n, 0, r)),
        ),
        compiler_params=pltpu.CompilerParams(
            dimension_semantics=("parallel", "parallel"),
            vmem_limit_bytes=_VMEM_LIMIT_BYTES,
        ),
    )(conv, scale2, shift2)

    # (N, Cout, Ho*Wo) -> NCHW; contiguous reshape, no data movement.
    return y.reshape(N, Cout, Ho, Wo)
    # TODO(synk): BatchNorm2d running_mean/var buffer updates (training-state
    # side effects) are not modeled; only the forward output is produced.


def _reference_forward(x_nchw, weight_oihw, gamma, beta, *, stride=1):
    """Pure-JAX reference (lax conv + BN(train) + ReLU) for validation."""
    k = weight_oihw.shape[-1]
    pad = (k - 1) // 2
    conv = lax.conv_general_dilated(
        x_nchw, weight_oihw,
        window_strides=(stride, stride),
        padding=((pad, pad), (pad, pad)),
        dimension_numbers=("NCHW", "OIHW", "NCHW"),
    )
    mean = jnp.mean(conv, axis=(0, 2, 3), keepdims=True)
    var = jnp.mean((conv - mean) ** 2, axis=(0, 2, 3), keepdims=True)
    xhat = (conv - mean) * lax.rsqrt(var + BN_EPS)
    y = xhat * gamma.reshape(1, -1, 1, 1) + beta.reshape(1, -1, 1, 1)
    return jnp.maximum(y, 0.0)


if __name__ == "__main__":
    # Module config: convolution(k=3, inp_dim=4, out_dim=8, stride=1, with_bn=True)
    k, inp_dim, out_dim, stride = 3, 4, 8, 1
    N, H, W = 2, 16, 16

    key = jax.random.PRNGKey(0)
    kx_, kw_, kg_, kb_ = jax.random.split(key, 4)

    x = jax.random.normal(kx_, (N, inp_dim, H, W), dtype=jnp.float32)
    weight = 0.1 * jax.random.normal(kw_, (out_dim, inp_dim, k, k), dtype=jnp.float32)
    gamma = 1.0 + 0.1 * jax.random.normal(kg_, (out_dim,), dtype=jnp.float32)
    beta = 0.1 * jax.random.normal(kb_, (out_dim,), dtype=jnp.float32)

    ref = jax.block_until_ready(
        _reference_forward(x, weight, gamma, beta, stride=stride)
    )

    # 1) auto row tile (single lane-dense tile per image at this size)
    out = jax.block_until_ready(
        convolution_forward(x, weight, gamma, beta, stride=stride)
    )
    np.testing.assert_allclose(np.asarray(out), np.asarray(ref), rtol=1e-4, atol=1e-4)

    # 2) explicit smaller row tile -> multi-tile grid, exercises the tiled
    #    two-pass BatchNorm (partial moments across tiles).
    out2 = jax.block_until_ready(
        convolution_forward(x, weight, gamma, beta, stride=stride, row_tile=8)
    )
    np.testing.assert_allclose(np.asarray(out2), np.asarray(ref), rtol=1e-4, atol=1e-4)

    print("KERNEL_OK")
</pallas_src>

<mosaic_0001>
module attributes {stable_mosaic.version = 11 : i64} {
  func.func @_bn_relu_kernel(%arg0: i32, %arg1: i32, %arg2: memref<1x8x256xf32, #tpu.memory_space<vmem>>, %arg3: memref<8x1xf32, #tpu.memory_space<vmem>>, %arg4: memref<8x1xf32, #tpu.memory_space<vmem>>, %arg5: memref<1x8x256xf32, #tpu.memory_space<vmem>>) attributes {dimension_semantics = [#tpu.dimension_semantics<parallel>, #tpu.dimension_semantics<parallel>], iteration_bounds = array<i64: 2, 1>, scalar_prefetch = 0 : i64, scratch_operands = 0 : i64, tpu.core_type = #tpu.core_type<tc>, window_params = [{transform_indices = @transform_0, window_bounds = array<i64: 1, 8, 256>}, {pipeline_mode = #tpu.pipeline_mode<synchronous>, transform_indices = @transform_1, window_bounds = array<i64: 8, 1>}, {pipeline_mode = #tpu.pipeline_mode<synchronous>, transform_indices = @transform_2, window_bounds = array<i64: 8, 1>}, {transform_indices = @transform_3, window_bounds = array<i64: 1, 8, 256>}]} {
    %c0 = arith.constant 0 : index
    %c0_0 = arith.constant 0 : index
    %c0_1 = arith.constant 0 : index
    %0 = vector.load %arg2[%c0, %c0_0, %c0_1] : memref<1x8x256xf32, #tpu.memory_space<vmem>>, vector<1x8x256xf32>
    %1 = vector.shape_cast %0 : vector<1x8x256xf32> to vector<8x256xf32>
    %c0_2 = arith.constant 0 : index
    %c0_3 = arith.constant 0 : index
    %2 = vector.load %arg3[%c0_2, %c0_3] : memref<8x1xf32, #tpu.memory_space<vmem>>, vector<8x1xf32>
    %3 = vector.broadcast %2 : vector<8x1xf32> to vector<8x256xf32>
    %4 = arith.mulf %1, %3 : vector<8x256xf32>
    %c0_4 = arith.constant 0 : index
    %c0_5 = arith.constant 0 : index
    %5 = vector.load %arg4[%c0_4, %c0_5] : memref<8x1xf32, #tpu.memory_space<vmem>>, vector<8x1xf32>
    %6 = vector.broadcast %5 : vector<8x1xf32> to vector<8x256xf32>
    %7 = arith.addf %4, %6 : vector<8x256xf32>
    %cst = arith.constant 0.000000e+00 : f32
    %8 = vector.broadcast %cst : f32 to vector<8x256xf32>
    %9 = arith.maximumf %7, %8 : vector<8x256xf32>
    %c0_6 = arith.constant 0 : index
    %c0_7 = arith.constant 0 : index
    %c0_8 = arith.constant 0 : index
    %10 = vector.load %arg5[%c0_6, %c0_7, %c0_8] : memref<1x8x256xf32, #tpu.memory_space<vmem>>, vector<1x8x256xf32>
    %11 = vector.shape_cast %10 : vector<1x8x256xf32> to vector<8x256xf32>
    %12 = vector.shape_cast %9 : vector<8x256xf32> to vector<1x8x256xf32>
    tpu.vector_store %arg5[%c0_6, %c0_7, %c0_8], %12 {strides = array<i32>} : memref<1x8x256xf32, #tpu.memory_space<vmem>>, vector<1x8x256xf32>,
    return
  }
  func.func @transform_0(%arg0: i32, %arg1: i32) -> (i32, i32, i32) {
    %c0_i32 = arith.constant 0 : i32
    %c0_i32_0 = arith.constant 0 : i32
    return %arg0, %c0_i32, %arg1 : i32, i32, i32
  }
  func.func @transform_1(%arg0: i32, %arg1: i32) -> (i32, i32) {
    %c0_i32 = arith.constant 0 : i32
    %c0_i32_0 = arith.constant 0 : i32
    %c0_i32_1 = arith.constant 0 : i32
    return %c0_i32, %c0_i32_0 : i32, i32
  }
  func.func @transform_2(%arg0: i32, %arg1: i32) -> (i32, i32) {
    %c0_i32 = arith.constant 0 : i32
    %c0_i32_0 = arith.constant 0 : i32
    %c0_i32_1 = arith.constant 0 : i32
    return %c0_i32, %c0_i32_0 : i32, i32
  }
  func.func @transform_3(%arg0: i32, %arg1: i32) -> (i32, i32, i32) {
    %c0_i32 = arith.constant 0 : i32
    %c0_i32_0 = arith.constant 0 : i32
    return %arg0, %c0_i32, %arg1 : i32, i32, i32
  }
}

module attributes {stable_mosaic.version = 11 : i64} {
  func.func @kernel(%arg0: i32, %arg1: i32, %arg2: memref<1x18x4x18xf32, #tpu.memory_space<vmem>>, %arg3: memref<8x36xf32, #tpu.memory_space<vmem>>, %arg4: memref<1x8x256xf32, #tpu.memory_space<vmem>>, %arg5: memref<1x1x8x2xf32, #tpu.memory_space<vmem>>, %arg6: memref<36x256xf32, #tpu.memory_space<vmem>>) attributes {dimension_semantics = [#tpu.dimension_semantics<parallel>, #tpu.dimension_semantics<parallel>], iteration_bounds = array<i64: 2, 1>, scalar_prefetch = 0 : i64, scratch_operands = 1 : i64, tpu.core_type = #tpu.core_type<tc>, window_params = [{transform_indices = @transform_0, window_bounds = array<i64: 1, 18, 4, 18>}, {pipeline_mode = #tpu.pipeline_mode<synchronous>, transform_indices = @transform_1, window_bounds = array<i64: 8, 36>}, {transform_indices = @transform_2, window_bounds = array<i64: 1, 8, 256>}, {transform_indices = @transform_3, window_bounds = array<i64: 1, 1, 8, 2>}]} {
    %c16_i32 = arith.constant 16 : i32
    %0 = arith.muli %arg1, %c16_i32 : i32
    %1 = tpu.assume_multiple %0, 16 : i32
    %c0_i32 = arith.constant 0 : i32
    %2 = arith.addi %1, %c0_i32 : i32
    %c0 = arith.constant 0 : index
    %3 = arith.index_cast %2 : i32 to index
    %c0_0 = arith.constant 0 : index
    %c0_1 = arith.constant 0 : index
    %4 = vector.load %arg2[%c0, %3, %c0_0, %c0_1] : memref<1x18x4x18xf32, #tpu.memory_space<vmem>>, vector<1x1x4x18xf32>
    %5 = vector.shape_cast %4 : vector<1x1x4x18xf32> to vector<4x18xf32>
    %c1_i32 = arith.constant 1 : i32
    %6 = arith.addi %1, %c1_i32 : i32
    %c0_2 = arith.constant 0 : index
    %7 = arith.index_cast %6 : i32 to index
    %c0_3 = arith.constant 0 : index
    %c0_4 = arith.constant 0 : index
    %8 = vector.load %arg2[%c0_2, %7, %c0_3, %c0_4] : memref<1x18x4x18xf32, #tpu.memory_space<vmem>>, vector<1x1x4x18xf32>
    %9 = vector.shape_cast %8 : vector<1x1x4x18xf32> to vector<4x18xf32>
    %c2_i32 = arith.constant 2 : i32
    %10 = arith.addi %1, %c2_i32 : i32
    %c0_5 = arith.constant 0 : index
    %11 = arith.index_cast %10 : i32 to index
    %c0_6 = arith.constant 0 : index
    %c0_7 = arith.constant 0 : index
    %12 = vector.load %arg2[%c0_5, %11, %c0_6, %c0_7] : memref<1x18x4x18xf32, #tpu.memory_space<vmem>>, vector<1x1x4x18xf32>
    %13 = vector.shape_cast %12 : vector<1x1x4x18xf32> to vector<4x18xf32>
    %c3_i32 = arith.constant 3 : i32
    %14 = arith.addi %1, %c3_i32 : i32
    %c0_8 = arith.constant 0 : index
    %15 = arith.index_cast %14 : i32 to index
    %c0_9 = arith.constant 0 : index
    %c0_10 = arith.constant 0 : index
    %16 = vector.load %arg2[%c0_8, %15, %c0_9, %c0_10] : memref<1x18x4x18xf32, #tpu.memory_space<vmem>>, vector<1x1x4x18xf32>
    %17 = vector.shape_cast %16 : vector<1x1x4x18xf32> to vector<4x18xf32>
    %c4_i32 = arith.constant 4 : i32
    %18 = arith.addi %1, %c4_i32 : i32
    %c0_11 = arith.constant 0 : index
    %19 = arith.index_cast %18 : i32 to index
    %c0_12 = arith.constant 0 : index
    %c0_13 = arith.constant 0 : index
    %20 = vector.load %arg2[%c0_11, %19, %c0_12, %c0_13] : memref<1x18x4x18xf32, #tpu.memory_space<vmem>>, vector<1x1x4x18xf32>
    %21 = vector.shape_cast %20 : vector<1x1x4x18xf32> to vector<4x18xf32>
    %c5_i32 = arith.constant 5 : i32
    %22 = arith.addi %1, %c5_i32 : i32
    %c0_14 = arith.constant 0 : index
    %23 = arith.index_cast %22 : i32 to index
    %c0_15 = arith.constant 0 : index
    %c0_16 = arith.constant 0 : index
    %24 = vector.load %arg2[%c0_14, %23, %c0_15, %c0_16] : memref<1x18x4x18xf32, #tpu.memory_space<vmem>>, vector<1x1x4x18xf32>
    %25 = vector.shape_cast %24 : vector<1x1x4x18xf32> to vector<4x18xf32>
    %c6_i32 = arith.constant 6 : i32
    %26 = arith.addi %1, %c6_i32 : i32
    %c0_17 = arith.constant 0 : index
    %27 = arith.index_cast %26 : i32 to index
    %c0_18 = arith.constant 0 : index
    %c0_19 = arith.constant 0 : index
    %28 = vector.load %arg2[%c0_17, %27, %c0_18, %c0_19] : memref<1x18x4x18xf32, #tpu.memory_space<vmem>>, vector<1x1x4x18xf32>
    %29 = vector.shape_cast %28 : vector<1x1x4x18xf32> to vector<4x18xf32>
    %c7_i32 = arith.constant 7 : i32
    %30 = arith.addi %1, %c7_i32 : i32
    %c0_20 = arith.constant 0 : index
    %31 = arith.index_cast %30 : i32 to index
    %c0_21 = arith.constant 0 : index
    %c0_22 = arith.constant 0 : index
    %32 = vector.load %arg2[%c0_20, %31, %c0_21, %c0_22] : memref<1x18x4x18xf32, #tpu.memory_space<vmem>>, vector<1x1x4x18xf32>
    %33 = vector.shape_cast %32 : vector<1x1x4x18xf32> to vector<4x18xf32>
    %c8_i32 = arith.constant 8 : i32
    %34 = arith.addi %1, %c8_i32 : i32
    %c0_23 = arith.constant 0 : index
    %35 = arith.index_cast %34 : i32 to index
    %c0_24 = arith.constant 0 : index
    %c0_25 = arith.constant 0 : index
    %36 = vector.load %arg2[%c0_23, %35, %c0_24, %c0_25] : memref<1x18x4x18xf32, #tpu.memory_space<vmem>>, vector<1x1x4x18xf32>
    %37 = vector.shape_cast %36 : vector<1x1x4x18xf32> to vector<4x18xf32>
    %c9_i32 = arith.constant 9 : i32
    %38 = arith.addi %1, %c9_i32 : i32
    %c0_26 = arith.constant 0 : index
    %39 = arith.index_cast %38 : i32 to index
    %c0_27 = arith.constant 0 : index
    %c0_28 = arith.constant 0 : index
    %40 = vector.load %arg2[%c0_26, %39, %c0_27, %c0_28] : memref<1x18x4x18xf32, #tpu.memory_space<vmem>>, vector<1x1x4x18xf32>
    %41 = vector.shape_cast %40 : vector<1x1x4x18xf32> to vector<4x18xf32>
    %c10_i32 = arith.constant 10 : i32
    %42 = arith.addi %1, %c10_i32 : i32
    %c0_29 = arith.constant 0 : index
    %43 = arith.index_cast %42 : i32 to index
    %c0_30 = arith.constant 0 : index
    %c0_31 = arith.constant 0 : index
    %44 = vector.load %arg2[%c0_29, %43, %c0_30, %c0_31] : memref<1x18x4x18xf32, #tpu.memory_space<vmem>>, vector<1x1x4x18xf32>
    %45 = vector.shape_cast %44 : vector<1x1x4x18xf32> to vector<4x18xf32>
    %c11_i32 = arith.constant 11 : i32
    %46 = arith.addi %1, %c11_i32 : i32
    %c0_32 = arith.constant 0 : index
    %47 = arith.index_cast %46 : i32 to index
    %c0_33 = arith.constant 0 : index
    %c0_34 = arith.constant 0 : index
    %48 = vector.load %arg2[%c0_32, %47, %c0_33, %c0_34] : memref<1x18x4x18xf32, #tpu.memory_space<vmem>>, vector<1x1x4x18xf32>
    %49 = vector.shape_cast %48 : vector<1x1x4x18xf32> to vector<4x18xf32>
    %c12_i32 = arith.constant 12 : i32
    %50 = arith.addi %1, %c12_i32 : i32
    %c0_35 = arith.constant 0 : index
    %51 = arith.index_cast %50 : i32 to index
    %c0_36 = arith.constant 0 : index
    %c0_37 = arith.constant 0 : index
    %52 = vector.load %arg2[%c0_35, %51, %c0_36, %c0_37] : memref<1x18x4x18xf32, #tpu.memory_space<vmem>>, vector<1x1x4x18xf32>
    %53 = vector.shape_cast %52 : vector<1x1x4x18xf32> to vector<4x18xf32>
    %c13_i32 = arith.constant 13 : i32
    %54 = arith.addi %1, %c13_i32 : i32
    %c0_38 = arith.constant 0 : index
    %55 = arith.index_cast %54 : i32 to index
    %c0_39 = arith.constant 0 : index
    %c0_40 = arith.constant 0 : index
    %56 = vector.load %arg2[%c0_38, %55, %c0_39, %c0_40] : memref<1x18x4x18xf32, #tpu.memory_space<vmem>>, vector<1x1x4x18xf32>
    %57 = vector.shape_cast %56 : vector<1x1x4x18xf32> to vector<4x18xf32>
    %c14_i32 = arith.constant 14 : i32
    %58 = arith.addi %1, %c14_i32 : i32
    %c0_41 = arith.constant 0 : index
    %59 = arith.index_cast %58 : i32 to index
    %c0_42 = arith.constant 0 : index
    %c0_43 = arith.constant 0 : index
    %60 = vector.load %arg2[%c0_41, %59, %c0_42, %c0_43] : memref<1x18x4x18xf32, #tpu.memory_space<vmem>>, vector<1x1x4x18xf32>
    %61 = vector.shape_cast %60 : vector<1x1x4x18xf32> to vector<4x18xf32>
    %c15_i32 = arith.constant 15 : i32
    %62 = arith.addi %1, %c15_i32 : i32
    %c0_44 = arith.constant 0 : index
    %63 = arith.index_cast %62 : i32 to index
    %c0_45 = arith.constant 0 : index
    %c0_46 = arith.constant 0 : index
    %64 = vector.load %arg2[%c0_44, %63, %c0_45, %c0_46] : memref<1x18x4x18xf32, #tpu.memory_space<vmem>>, vector<1x1x4x18xf32>
    %65 = vector.shape_cast %64 : vector<1x1x4x18xf32> to vector<4x18xf32>
    %c16_i32_47 = arith.constant 16 : i32
    %66 = arith.addi %1, %c16_i32_47 : i32
    %c0_48 = arith.constant 0 : index
    %67 = arith.index_cast %66 : i32 to index
    %c0_49 = arith.constant 0 : index
    %c0_50 = arith.constant 0 : index
    %68 = vector.load %arg2[%c0_48, %67, %c0_49, %c0_50] : memref<1x18x4x18xf32, #tpu.memory_space<vmem>>, vector<1x1x4x18xf32>
    %69 = vector.shape_cast %68 : vector<1x1x4x18xf32> to vector<4x18xf32>
    %c17_i32 = arith.constant 17 : i32
    %70 = arith.addi %1, %c17_i32 : i32
    %c0_51 = arith.constant 0 : index
    %71 = arith.index_cast %70 : i32 to index
    %c0_52 = arith.constant 0 : index
    %c0_53 = arith.constant 0 : index
    %72 = vector.load %arg2[%c0_51, %71, %c0_52, %c0_53] : memref<1x18x4x18xf32, #tpu.memory_space<vmem>>, vector<1x1x4x18xf32>
    %73 = vector.shape_cast %72 : vector<1x1x4x18xf32> to vector<4x18xf32>
    %74 = vector.extract_strided_slice %5 {offsets = [0, 0], sizes = [4, 16], strides = [1, 1]} : vector<4x18xf32> to vector<4x16xf32>
    %c0_54 = arith.constant 0 : index
    %c0_55 = arith.constant 0 : index
    %75 = vector.load %arg6[%c0_54, %c0_55] : memref<36x256xf32, #tpu.memory_space<vmem>>, vector<4x16xf32>
    tpu.vector_store %arg6[%c0_54, %c0_55], %74 {strides = array<i32>} : memref<36x256xf32, #tpu.memory_space<vmem>>, vector<4x16xf32>,
    %76 = vector.extract_strided_slice %5 {offsets = [0, 1], sizes = [4, 16], strides = [1, 1]} : vector<4x18xf32> to vector<4x16xf32>
    %c4 = arith.constant 4 : index
    %c0_56 = arith.constant 0 : index
    %77 = vector.load %arg6[%c4, %c0_56] : memref<36x256xf32, #tpu.memory_space<vmem>>, vector<4x16xf32>
    tpu.vector_store %arg6[%c4, %c0_56], %76 {strides = array<i32>} : memref<36x256xf32, #tpu.memory_space<vmem>>, vector<4x16xf32>,
    %78 = vector.extract_strided_slice %5 {offsets = [0, 2], sizes = [4, 16], strides = [1, 1]} : vector<4x18xf32> to vector<4x16xf32>
    %c8 = arith.constant 8 : index
    %c0_57 = arith.constant 0 : index
    %79 = vector.load %arg6[%c8, %c0_57] : memref<36x256xf32, #tpu.memory_space<vmem>>, vector<4x16xf32>
    tpu.vector_store %arg6[%c8, %c0_57], %78 {strides = array<i32>} : memref<36x256xf32, #tpu.memory_space<vmem>>, vector<4x16xf32>,
    %80 = vector.extract_strided_slice %9 {offsets = [0, 0], sizes = [4, 16], strides = [1, 1]} : vector<4x18xf32> to vector<4x16xf32>
    %c12 = arith.constant 12 : index
    %c0_58 = arith.constant 0 : index
    %81 = vector.load %arg6[%c12, %c0_58] : memref<36x256xf32, #tpu.memory_space<vmem>>, vector<4x16xf32>
    tpu.vector_store %arg6[%c12, %c0_58], %80 {strides = array<i32>} : memref<36x256xf32, #tpu.memory_space<vmem>>, vector<4x16xf32>,
    %82 = vector.extract_strided_slice %9 {offsets = [0, 1], sizes = [4, 16], strides = [1, 1]} : vector<4x18xf32> to vector<4x16xf32>
    %c16 = arith.constant 16 : index
    %c0_59 = arith.constant 0 : index
    %83 = vector.load %arg6[%c16, %c0_59] : memref<36x256xf32, #tpu.memory_space<vmem>>, vector<4x16xf32>
    tpu.vector_store %arg6[%c16, %c0_59], %82 {strides = array<i32>} : memref<36x256xf32, #tpu.memory_space<vmem>>, vector<4x16xf32>,
    %84 = vector.extract_strided_slice %9 {offsets = [0, 2], sizes = [4, 16], strides = [1, 1]} : vector<4x18xf32> to vector<4x16xf32>
    %c20 = arith.constant 20 : index
    %c0_60 = arith.constant 0 : index
    %85 = vector.load %arg6[%c20, %c0_60] : memref<36x256xf32, #tpu.memory_space<vmem>>, vector<4x16xf32>
    tpu.vector_store %arg6[%c20, %c0_60], %84 {strides = array<i32>} : memref<36x256xf32, #tpu.memory_space<vmem>>, vector<4x16xf32>,
    %86 = vector.extract_strided_slice %13 {offsets = [0, 0], sizes = [4, 16], strides = [1, 1]} : vector<4x18xf32> to vector<4x16xf32>
    %c24 = arith.constant 24 : index
    %c0_61 = arith.constant 0 : index
    %87 = vector.load %arg6[%c24, %c0_61] : memref<36x256xf32, #tpu.memory_space<vmem>>, vector<4x16xf32>
    tpu.vector_store %arg6[%c24, %c0_61], %86 {strides = array<i32>} : memref<36x256xf32, #tpu.memory_space<vmem>>, vector<4x16xf32>,
    %88 = vector.extract_strided_slice %13 {offsets = [0, 1], sizes = [4, 16], strides = [1, 1]} : vector<4x18xf32> to vector<4x16xf32>
    %c28 = arith.constant 28 : index
    %c0_62 = arith.constant 0 : index
    %89 = vector.load %arg6[%c28, %c0_62] : memref<36x256xf32, #tpu.memory_space<vmem>>, vector<4x16xf32>
    tpu.vector_store %arg6[%c28, %c0_62], %88 {strides = array<i32>} : memref<36x256xf32, #tpu.memory_space<vmem>>, vector<4x16xf32>,
    %90 = vector.extract_strided_slice %13 {offsets = [0, 2], sizes = [4, 16], strides = [1, 1]} : vector<4x18xf32> to vector<4x16xf32>
    %c32 = arith.constant 32 : index
    %c0_63 = arith.constant 0 : index
    %91 = vector.load %arg6[%c32, %c0_63] : memref<36x256xf32, #tpu.memory_space<vmem>>, vector<4x16xf32>
    tpu.vector_store %arg6[%c32, %c0_63], %90 {strides = array<i32>} : memref<36x256xf32, #tpu.memory_space<vmem>>, vector<4x16xf32>,
    %92 = vector.extract_strided_slice %9 {offsets = [0, 0], sizes = [4, 16], strides = [1, 1]} : vector<4x18xf32> to vector<4x16xf32>
    %c0_64 = arith.constant 0 : index
    %c16_65 = arith.constant 16 : index
    %93 = vector.load %arg6[%c0_64, %c16_65] : memref<36x256xf32, #tpu.memory_space<vmem>>, vector<4x16xf32>
    tpu.vector_store %arg6[%c0_64, %c16_65], %92 {strides = array<i32>} : memref<36x256xf32, #tpu.memory_space<vmem>>, vector<4x16xf32>,
    %94 = vector.extract_strided_slice %9 {offsets = [0, 1], sizes = [4, 16], strides = [1, 1]} : vector<4x18xf32> to vector<4x16xf32>
    %c4_66 = arith.constant 4 : index
    %c16_67 = arith.constant 16 : index
    %95 = vector.load %arg6[%c4_66, %c16_67] : memref<36x256xf32, #tpu.memory_space<vmem>>, vector<4x16xf32>
    tpu.vector_store %arg6[%c4_66, %c16_67], %94 {strides = array<i32>} : memref<36x256xf32, #tpu.memory_space<vmem>>, vector<4x16xf32>,
    %96 = vector.extract_strided_slice %9 {offsets = [0, 2], sizes = [4, 16], strides = [1, 1]} : vector<4x18xf32> to vector<4x16xf32>
    %c8_68 = arith.constant 8 : index
    %c16_69 = arith.constant 16 : index
    %97 = vector.load %arg6[%c8_68, %c16_69] : memref<36x256xf32, #tpu.memory_space<vmem>>, vector<4x16xf32>
    tpu.vector_store %arg6[%c8_68, %c16_69], %96 {strides = array<i32>} : memref<36x256xf32, #tpu.memory_space<vmem>>, vector<4x16xf32>,
    %98 = vector.extract_strided_slice %13 {offsets = [0, 0], sizes = [4, 16], strides = [1, 1]} : vector<4x18xf32> to vector<4x16xf32>
    %c12_70 = arith.constant 12 : index
    %c16_71 = arith.constant 16 : index
    %99 = vector.load %arg6[%c12_70, %c16_71] : memref<36x256xf32, #tpu.memory_space<vmem>>, vector<4x16xf32>
    tpu.vector_store %arg6[%c12_70, %c16_71], %98 {strides = array<i32>} : memref<36x256xf32, #tpu.memory_space<vmem>>, vector<4x16xf32>,
    %100 = vector.extract_strided_slice %13 {offsets = [0, 1], sizes = [4, 16], strides = [1, 1]} : vector<4x18xf32> to vector<4x16xf32>
    %c16_72 = arith.constant 16 : index
    %c16_73 = arith.constant 16 : index
    %101 = vector.load %arg6[%c16_72, %c16_73] : memref<36x256xf32, #tpu.memory_space<vmem>>, vector<4x16xf32>
    tpu.vector_store %arg6[%c16_72, %c16_73], %100 {strides = array<i32>} : memref<36x256xf32, #tpu.memory_space<vmem>>, vector<4x16xf32>,
    %102 = vector.extract_strided_slice %13 {offsets = [0, 2], sizes = [4, 16], strides = [1, 1]} : vector<4x18xf32> to vector<4x16xf32>
    %c20_74 = arith.constant 20 : index
    %c16_75 = arith.constant 16 : index
    %103 = vector.load %arg6[%c20_74, %c16_75] : memref<36x256xf32, #tpu.memory_space<vmem>>, vector<4x16xf32>
    tpu.vector_store %arg6[%c20_74, %c16_75], %102 {strides = array<i32>} : memref<36x256xf32, #tpu.memory_space<vmem>>, vector<4x16xf32>,
    %104 = vector.extract_strided_slice %17 {offsets = [0, 0], sizes = [4, 16], strides = [1, 1]} : vector<4x18xf32> to vector<4x16xf32>
    %c24_76 = arith.constant 24 : index
    %c16_77 = arith.constant 16 : index
    %105 = vector.load %arg6[%c24_76, %c16_77] : memref<36x256xf32, #tpu.memory_space<vmem>>, vector<4x16xf32>
    tpu.vector_store %arg6[%c24_76, %c16_77], %104 {strides = array<i32>} : memref<36x256xf32, #tpu.memory_space<vmem>>, vector<4x16xf32>,
    %106 = vector.extract_strided_slice %17 {offsets = [0, 1], sizes = [4, 16], strides = [1, 1]} : vector<4x18xf32> to vector<4x16xf32>
    %c28_78 = arith.constant 28 : index
    %c16_79 = arith.constant 16 : index
    %107 = vector.load %arg6[%c28_78, %c16_79] : memref<36x256xf32, #tpu.memory_space<vmem>>, vector<4x16xf32>
    tpu.vector_store %arg6[%c28_78, %c16_79], %106 {strides = array<i32>} : memref<36x256xf32, #tpu.memory_space<vmem>>, vector<4x16xf32>,
    %108 = vector.extract_strided_slice %17 {offsets = [0, 2], sizes = [4, 16], strides = [1, 1]} : vector<4x18xf32> to vector<4x16xf32>
    %c32_80 = arith.constant 32 : index
    %c16_81 = arith.constant 16 : index
    %109 = vector.load %arg6[%c32_80, %c16_81] : memref<36x256xf32, #tpu.memory_space<vmem>>, vector<4x16xf32>
    tpu.vector_store %arg6[%c32_80, %c16_81], %108 {strides = array<i32>} : memref<36x256xf32, #tpu.memory_space<vmem>>, vector<4x16xf32>,
    %110 = vector.extract_strided_slice %13 {offsets = [0, 0], sizes = [4, 16], strides = [1, 1]} : vector<4x18xf32> to vector<4x16xf32>
    %c0_82 = arith.constant 0 : index
    %c32_83 = arith.constant 32 : index
    %111 = vector.load %arg6[%c0_82, %c32_83] : memref<36x256xf32, #tpu.memory_space<vmem>>, vector<4x16xf32>
    tpu.vector_store %arg6[%c0_82, %c32_83], %110 {strides = array<i32>} : memref<36x256xf32, #tpu.memory_space<vmem>>, vector<4x16xf32>,
    %112 = vector.extract_strided_slice %13 {offsets = [0, 1], sizes = [4, 16], strides = [1, 1]} : vector<4x18xf32> to vector<4x16xf32>
    %c4_84 = arith.constant 4 : index
    %c32_85 = arith.constant 32 : index
    %113 = vector.load %arg6[%c4_84, %c32_85] : memref<36x256xf32, #tpu.memory_space<vmem>>, vector<4x16xf32>
    tpu.vector_store %arg6[%c4_84, %c32_85], %112 {strides = array<i32>} : memref<36x256xf32, #tpu.memory_space<vmem>>, vector<4x16xf32>,
    %114 = vector.extract_strided_slice %13 {offsets = [0, 2], sizes = [4, 16], strides = [1, 1]} : vector<4x18xf32> to vector<4x16xf32>
    %c8_86 = arith.constant 8 : index
    %c32_87 = arith.constant 32 : index
    %115 = vector.load %arg6[%c8_86, %c32_87] : memref<36x256xf32, #tpu.memory_space<vmem>>, vector<4x16xf32>
    tpu.vector_store %arg6[%c8_86, %c32_87], %114 {strides = array<i32>} : memref<36x256xf32, #tpu.memory_space<vmem>>, vector<4x16xf32>,
    %116 = vector.extract_strided_slice %17 {offsets = [0, 0], sizes = [4, 16], strides = [1, 1]} : vector<4x18xf32> to vector<4x16xf32>
    %c12_88 = arith.constant 12 : index
    %c32_89 = arith.constant 32 : index
    %117 = vector.load %arg6[%c12_88, %c32_89] : memref<36x256xf32, #tpu.memory_space<vmem>>, vector<4x16xf32>
    tpu.vector_store %arg6[%c12_88, %c32_89], %116 {strides = array<i32>} : memref<36x256xf32, #tpu.memory_space<vmem>>, vector<4x16xf32>,
    %118 = vector.extract_strided_slice %17 {offsets = [0, 1], sizes = [4, 16], strides = [1, 1]} : vector<4x18xf32> to vector<4x16xf32>
    %c16_90 = arith.constant 16 : index
    %c32_91 = arith.constant 32 : index
    %119 = vector.load %arg6[%c16_90, %c32_91] : memref<36x256xf32, #tpu.memory_space<vmem>>, vector<4x16xf32>
    tpu.vector_store %arg6[%c16_90, %c32_91], %118 {strides = array<i32>} : memref<36x256xf32, #tpu.memory_space<vmem>>, vector<4x16xf32>,
    %120 = vector.extract_strided_slice %17 {offsets = [0, 2], sizes = [4, 16], strides = [1, 1]} : vector<4x18xf32> to vector<4x16xf32>
    %c20_92 = arith.constant 20 : index
    %c32_93 = arith.constant 32 : index
    %121 = vector.load %arg6[%c20_92, %c32_93] : memref<36x256xf32, #tpu.memory_space<vmem>>, vector<4x16xf32>
    tpu.vector_store %arg6[%c20_92, %c32_93], %120 {strides = array<i32>} : memref<36x256xf32, #tpu.memory_space<vmem>>, vector<4x16xf32>,
    %122 = vector.extract_strided_slice %21 {offsets = [0, 0], sizes = [4, 16], strides = [1, 1]} : vector<4x18xf32> to vector<4x16xf32>
    %c24_94 = arith.constant 24 : index
    %c32_95 = arith.constant 32 : index
    %123 = vector.load %arg6[%c24_94, %c32_95] : memref<36x256xf32, #tpu.memory_space<vmem>>, vector<4x16xf32>
    tpu.vector_store %arg6[%c24_94, %c32_95], %122 {strides = array<i32>} : memref<36x256xf32, #tpu.memory_space<vmem>>, vector<4x16xf32>,
    %124 = vector.extract_strided_slice %21 {offsets = [0, 1], sizes = [4, 16], strides = [1, 1]} : vector<4x18xf32> to vector<4x16xf32>
    %c28_96 = arith.constant 28 : index
    %c32_97 = arith.constant 32 : index
    %125 = vector.load %arg6[%c28_96, %c32_97] : memref<36x256xf32, #tpu.memory_space<vmem>>, vector<4x16xf32>
    tpu.vector_store %arg6[%c28_96, %c32_97], %124 {strides = array<i32>} : memref<36x256xf32, #tpu.memory_space<vmem>>, vector<4x16xf32>,
    %126 = vector.extract_strided_slice %21 {offsets = [0, 2], sizes = [4, 16], strides = [1, 1]} : vector<4x18xf32> to vector<4x16xf32>
    %c32_98 = arith.constant 32 : index
    %c32_99 = arith.constant 32 : index
    %127 = vector.load %arg6[%c32_98, %c32_99] : memref<36x256xf32, #tpu.memory_space<vmem>>, vector<4x16xf32>
    tpu.vector_store %arg6[%c32_98, %c32_99], %126 {strides = array<i32>} : memref<36x256xf32, #tpu.memory_space<vmem>>, vector<4x16xf32>,
    %128 = vector.extract_strided_slice %17 {offsets = [0, 0], sizes = [4, 16], strides = [1, 1]} : vector<4x18xf32> to vector<4x16xf32>
    %c0_100 = arith.constant 0 : index
    %c48 = arith.constant 48 : index
    %129 = vector.load %arg6[%c0_100, %c48] : memref<36x256xf32, #tpu.memory_space<vmem>>, vector<4x16xf32>
    tpu.vector_store %arg6[%c0_100, %c48], %128 {strides = array<i32>} : memref<36x256xf32, #tpu.memory_space<vmem>>, vector<4x16xf32>,
    %130 = vector.extract_strided_slice %17 {offsets = [0, 1], sizes = [4, 16], strides = [1, 1]} : vector<4x18xf32> to vector<4x16xf32>
    %c4_101 = arith.constant 4 : index
    %c48_102 = arith.constant 48 : index
    %131 = vector.load %arg6[%c4_101, %c48_102] : memref<36x256xf32, #tpu.memory_space<vmem>>, vector<4x16xf32>
    tpu.vector_store %arg6[%c4_101, %c48_102], %130 {strides = array<i32>} : memref<36x256xf32, #tpu.memory_space<vmem>>, vector<4x16xf32>,
    %132 = vector.extract_strided_slice %17 {offsets = [0, 2], sizes = [4, 16], strides = [1, 1]} : vector<4x18xf32> to vector<4x16xf32>
    %c8_103 = arith.constant 8 : index
    %c48_104 = arith.constant 48 : index
    %133 = vector.load %arg6[%c8_103, %c48_104] : memref<36x256xf32, #tpu.memory_space<vmem>>, vector<4x16xf32>
    tpu.vector_store %arg6[%c8_103, %c48_104], %132 {strides = array<i32>} : memref<36x256xf32, #tpu.memory_space<vmem>>, vector<4x16xf32>,
    %134 = vector.extract_strided_slice %21 {offsets = [0, 0], sizes = [4, 16], strides = [1, 1]} : vector<4x18xf32> to vector<4x16xf32>
    %c12_105 = arith.constant 12 : index
    %c48_106 = arith.constant 48 : index
    %135 = vector.load %arg6[%c12_105, %c48_106] : memref<36x256xf32, #tpu.memory_space<vmem>>, vector<4x16xf32>
    tpu.vector_store %arg6[%c12_105, %c48_106], %134 {strides = array<i32>} : memref<36x256xf32, #tpu.memory_space<vmem>>, vector<4x16xf32>,
    %136 = vector.extract_strided_slice %21 {offsets = [0, 1], sizes = [4, 16], strides = [1, 1]} : vector<4x18xf32> to vector<4x16xf32>
    %c16_107 = arith.constant 16 : index
    %c48_108 = arith.constant 48 : index
    %137 = vector.load %arg6[%c16_107, %c48_108] : memref<36x256xf32, #tpu.memory_space<vmem>>, vector<4x16xf32>
    tpu.vector_store %arg6[%c16_107, %c48_108], %136 {strides = array<i32>} : memref<36x256xf32, #tpu.memory_space<vmem>>, vector<4x16xf32>,
    %138 = vector.extract_strided_slice %21 {offsets = [0, 2], sizes = [4, 16], strides = [1, 1]} : vector<4x18xf32> to vector<4x16xf32>
    %c20_109 = arith.constant 20 : index
    %c48_110 = arith.constant 48 : index
    %139 = vector.load %arg6[%c20_109, %c48_110] : memref<36x256xf32, #tpu.memory_space<vmem>>, vector<4x16xf32>
    tpu.vector_store %arg6[%c20_109, %c48_110], %138 {strides = array<i32>} : memref<36x256xf32, #tpu.memory_space<vmem>>, vector<4x16xf32>,
    %140 = vector.extract_strided_slice %25 {offsets = [0, 0], sizes = [4, 16], strides = [1, 1]} : vector<4x18xf32> to vector<4x16xf32>
    %c24_111 = arith.constant 24 : index
    %c48_112 = arith.constant 48 : index
    %141 = vector.load %arg6[%c24_111, %c48_112] : memref<36x256xf32, #tpu.memory_space<vmem>>, vector<4x16xf32>
    tpu.vector_store %arg6[%c24_111, %c48_112], %140 {strides = array<i32>} : memref<36x256xf32, #tpu.memory_space<vmem>>, vector<4x16xf32>,
    %142 = vector.extract_strided_slice %25 {offsets = [0, 1], sizes = [4, 16], strides = [1, 1]} : vector<4x18xf32> to vector<4x16xf32>
    %c28_113 = arith.constant 28 : index
    %c48_114 = arith.constant 48 : index
    %143 = vector.load %arg6[%c28_113, %c48_114] : memref<36x256xf32, #tpu.memory_space<vmem>>, vector<4x16xf32>
    tpu.vector_store %arg6[%c28_113, %c48_114], %142 {strides = array<i32>} : memref<36x256xf32, #tpu.memory_space<vmem>>, vector<4x16xf32>,
    %144 = vector.extract_strided_slice %25 {offsets = [0, 2], sizes = [4, 16], strides = [1, 1]} : vector<4x18xf32> to vector<4x16xf32>
    %c32_115 = arith.constant 32 : index
    %c48_116 = arith.constant 48 : index
    %145 = vector.load %arg6[%c32_115, %c48_116] : memref<36x256xf32, #tpu.memory_space<vmem>>, vector<4x16xf32>
    tpu.vector_store %arg6[%c32_115, %c48_116], %144 {strides = array<i32>} : memref<36x256xf32, #tpu.memory_space<vmem>>, vector<4x16xf32>,
    %146 = vector.extract_strided_slice %21 {offsets = [0, 0], sizes = [4, 16], strides = [1, 1]} : vector<4x18xf32> to vector<4x16xf32>
    %c0_117 = arith.constant 0 : index
    %c64 = arith.constant 64 : index
    %147 = vector.load %arg6[%c0_117, %c64] : memref<36x256xf32, #tpu.memory_space<vmem>>, vector<4x16xf32>
    tpu.vector_store %arg6[%c0_117, %c64], %146 {strides = array<i32>} : memref<36x256xf32, #tpu.memory_space<vmem>>, vector<4x16xf32>,
    %148 = vector.extract_strided_slice %21 {offsets = [0, 1], sizes = [4, 16], strides = [1, 1]} : vector<4x18xf32> to vector<4x16xf32>
    %c4_118 = arith.constant 4 : index
    %c64_119 = arith.constant 64 : index
    %149 = vector.load %arg6[%c4_118, %c64_119] : memref<36x256xf32, #tpu.memory_space<vmem>>, vector<4x16xf32>
    tpu.vector_store %arg6[%c4_118, %c64_119], %148 {strides = array<i32>} : memref<36x256xf32, #tpu.memory_space<vmem>>, vector<4x16xf32>,
    %150 = vector.extract_strided_slice %21 {offsets = [0, 2], sizes = [4, 16], strides = [1, 1]} : vector<4x18xf32> to vector<4x16xf32>
    %c8_120 = arith.constant 8 : index
    %c64_121 = arith.constant 64 : index
    %151 = vector.load %arg6[%c8_120, %c64_121] : memref<36x256xf32, #tpu.memory_space<vmem>>, vector<4x16xf32>
    tpu.vector_store %arg6[%c8_120, %c64_121], %150 {strides = array<i32>} : memref<36x256xf32, #tpu.memory_space<vmem>>, vector<4x16xf32>,
    %152 = vector.extract_strided_slice %25 {offsets = [0, 0], sizes = [4, 16], strides = [1, 1]} : vector<4x18xf32> to vector<4x16xf32>
    %c12_122 = arith.constant 12 : index
    %c64_123 = arith.constant 64 : index
    %153 = vector.load %arg6[%c12_122, %c64_123] : memref<36x256xf32, #tpu.memory_space<vmem>>, vector<4x16xf32>
    tpu.vector_store %arg6[%c12_122, %c64_123], %152 {strides = array<i32>} : memref<36x256xf32, #tpu.memory_space<vmem>>, vector<4x16xf32>,
    %154 = vector.extract_strided_slice %25 {offsets = [0, 1], sizes = [4, 16], strides = [1, 1]} : vector<4x18xf32> to vector<4x16xf32>
    %c16_124 = arith.constant 16 : index
    %c64_125 = arith.constant 64 : index
    %155 = vector.load %arg6[%c16_124, %c64_125] : memref<36x256xf32, #tpu.memory_space<vmem>>, vector<4x16xf32>
    tpu.vector_store %arg6[%c16_124, %c64_125], %154 {strides = array<i32>} : memref<36x256xf32, #tpu.memory_space<vmem>>, vector<4x16xf32>,
    %156 = vector.extract_strided_slice %25 {offsets = [0, 2], sizes = [4, 16], strides = [1, 1]} : vector<4x18xf32> to vector<4x16xf32>
    %c20_126 = arith.constant 20 : index
    %c64_127 = arith.constant 64 : index
    %157 = vector.load %arg6[%c20_126, %c64_127] : memref<36x256xf32, #tpu.memory_space<vmem>>, vector<4x16xf32>
    tpu.vector_store %arg6[%c20_126, %c64_127], %156 {strides = array<i32>} : memref<36x256xf32, #tpu.memory_space<vmem>>, vector<4x16xf32>,
    %158 = vector.extract_strided_slice %29 {offsets = [0, 0], sizes = [4, 16], strides = [1, 1]} : vector<4x18xf32> to vector<4x16xf32>
    %c24_128 = arith.constant 24 : index
    %c64_129 = arith.constant 64 : index
    %159 = vector.load %arg6[%c24_128, %c64_129] : memref<36x256xf32, #tpu.memory_space<vmem>>, vector<4x16xf32>
    tpu.vector_store %arg6[%c24_128, %c64_129], %158 {strides = array<i32>} : memref<36x256xf32, #tpu.memory_space<vmem>>, vector<4x16xf32>,
    %160 = vector.extract_strided_slice %29 {offsets = [0, 1], sizes = [4, 16], strides = [1, 1]} : vector<4x18xf32> to vector<4x16xf32>
    %c28_130 = arith.constant 28 : index
    %c64_131 = arith.constant 64 : index
    %161 = vector.load %arg6[%c28_130, %c64_131] : memref<36x256xf32, #tpu.memory_space<vmem>>, vector<4x16xf32>
    tpu.vector_store %arg6[%c28_130, %c64_131], %160 {strides = array<i32>} : memref<36x256xf32, #tpu.memory_space<vmem>>, vector<4x16xf32>,
    %162 = vector.extract_strided_slice %29 {offsets = [0, 2], sizes = [4, 16], strides = [1, 1]} : vector<4x18xf32> to vector<4x16xf32>
    %c32_132 = arith.constant 32 : index
    %c64_133 = arith.constant 64 : index
    %163 = vector.load %arg6[%c32_132, %c64_133] : memref<36x256xf32, #tpu.memory_space<vmem>>, vector<4x16xf32>
    tpu.vector_store %arg6[%c32_132, %c64_133], %162 {strides = array<i32>} : memref<36x256xf32, #tpu.memory_space<vmem>>, vector<4x16xf32>,
    %164 = vector.extract_strided_slice %25 {offsets = [0, 0], sizes = [4, 16], strides = [1, 1]} : vector<4x18xf32> to vector<4x16xf32>
    %c0_134 = arith.constant 0 : index
    %c80 = arith.constant 80 : index
    %165 = vector.load %arg6[%c0_134, %c80] : memref<36x256xf32, #tpu.memory_space<vmem>>, vector<4x16xf32>
    tpu.vector_store %arg6[%c0_134, %c80], %164 {strides = array<i32>} : memref<36x256xf32, #tpu.memory_space<vmem>>, vector<4x16xf32>,
    %166 = vector.extract_strided_slice %25 {offsets = [0, 1], sizes = [4, 16], strides = [1, 1]} : vector<4x18xf32> to vector<4x16xf32>
    %c4_135 = arith.constant 4 : index
    %c80_136 = arith.constant 80 : index
    %167 = vector.load %arg6[%c4_135, %c80_136] : memref<36x256xf32, #tpu.memory_space<vmem>>, vector<4x16xf32>
    tpu.vector_store %arg6[%c4_135, %c80_136], %166 {strides = array<i32>} : memref<36x256xf32, #tpu.memory_space<vmem>>, vector<4x16xf32>,
    %168 = vector.extract_strided_slice %25 {offsets = [0, 2], sizes = [4, 16], strides = [1, 1]} : vector<4x18xf32> to vector<4x16xf32>
    %c8_137 = arith.constant 8 : index
    %c80_138 = arith.constant 80 : index
    %169 = vector.load %arg6[%c8_137, %c80_138] : memref<36x256xf32, #tpu.memory_space<vmem>>, vector<4x16xf32>
    tpu.vector_store %arg6[%c8_137, %c80_138], %168 {strides = array<i32>} : memref<36x256xf32, #tpu.memory_space<vmem>>, vector<4x16xf32>,
    %170 = vector.extract_strided_slice %29 {offsets = [0, 0], sizes = [4, 16], strides = [1, 1]} : vector<4x18xf32> to vector<4x16xf32>
    %c12_139 = arith.constant 12 : index
    %c80_140 = arith.constant 80 : index
    %171 = vector.load %arg6[%c12_139, %c80_140] : memref<36x256xf32, #tpu.memory_space<vmem>>, vector<4x16xf32>
    tpu.vector_store %arg6[%c12_139, %c80_140], %170 {strides = array<i32>} : memref<36x256xf32, #tpu.memory_space<vmem>>, vector<4x16xf32>,
    %172 = vector.extract_strided_slice %29 {offsets = [0, 1], sizes = [4, 16], strides = [1, 1]} : vector<4x18xf32> to vector<4x16xf32>
    %c16_141 = arith.constant 16 : index
    %c80_142 = arith.constant 80 : index
    %173 = vector.load %arg6[%c16_141, %c80_142] : memref<36x256xf32, #tpu.memory_space<vmem>>, vector<4x16xf32>
    tpu.vector_store %arg6[%c16_141, %c80_142], %172 {strides = array<i32>} : memref<36x256xf32, #tpu.memory_space<vmem>>, vector<4x16xf32>,
    %174 = vector.extract_strided_slice %29 {offsets = [0, 2], sizes = [4, 16], strides = [1, 1]} : vector<4x18xf32> to vector<4x16xf32>
    %c20_143 = arith.constant 20 : index
    %c80_144 = arith.constant 80 : index
    %175 = vector.load %arg6[%c20_143, %c80_144] : memref<36x256xf32, #tpu.memory_space<vmem>>, vector<4x16xf32>
    tpu.vector_store %arg6[%c20_143, %c80_144], %174 {strides = array<i32>} : memref<36x256xf32, #tpu.memory_space<vmem>>, vector<4x16xf32>,
    %176 = vector.extract_strided_slice %33 {offsets = [0, 0], sizes = [4, 16], strides = [1, 1]} : vector<4x18xf32> to vector<4x16xf32>
    %c24_145 = arith.constant 24 : index
    %c80_146 = arith.constant 80 : index
    %177 = vector.load %arg6[%c24_145, %c80_146] : memref<36x256xf32, #tpu.memory_space<vmem>>, vector<4x16xf32>
    tpu.vector_store %arg6[%c24_145, %c80_146], %176 {strides = array<i32>} : memref<36x256xf32, #tpu.memory_space<vmem>>, vector<4x16xf32>,
    %178 = vector.extract_strided_slice %33 {offsets = [0, 1], sizes = [4, 16], strides = [1, 1]} : vector<4x18xf32> to vector<4x16xf32>
    %c28_147 = arith.constant 28 : index
    %c80_148 = arith.constant 80 : index
    %179 = vector.load %arg6[%c28_147, %c80_148] : memref<36x256xf32, #tpu.memory_space<vmem>>, vector<4x16xf32>
    tpu.vector_store %arg6[%c28_147, %c80_148], %178 {strides = array<i32>} : memref<36x256xf32, #tpu.memory_space<vmem>>, vector<4x16xf32>,
    %180 = vector.extract_strided_slice %33 {offsets = [0, 2], sizes = [4, 16], strides = [1, 1]} : vector<4x18xf32> to vector<4x16xf32>
    %c32_149 = arith.constant 32 : index
    %c80_150 = arith.constant 80 : index
    %181 = vector.load %arg6[%c32_149, %c80_150] : memref<36x256xf32, #tpu.memory_space<vmem>>, vector<4x16xf32>
    tpu.vector_store %arg6[%c32_149, %c80_150], %180 {strides = array<i32>} : memref<36x256xf32, #tpu.memory_space<vmem>>, vector<4x16xf32>,
    %182 = vector.extract_strided_slice %29 {offsets = [0, 0], sizes = [4, 16], strides = [1, 1]} : vector<4x18xf32> to vector<4x16xf32>
    %c0_151 = arith.constant 0 : index
    %c96 = arith.constant 96 : index
    %183 = vector.load %arg6[%c0_151, %c96] : memref<36x256xf32, #tpu.memory_space<vmem>>, vector<4x16xf32>
    tpu.vector_store %arg6[%c0_151, %c96], %182 {strides = array<i32>} : memref<36x256xf32, #tpu.memory_space<vmem>>, vector<4x16xf32>,
    %184 = vector.extract_strided_slice %29 {offsets = [0, 1], sizes = [4, 16], strides = [1, 1]} : vector<4x18xf32> to vector<4x16xf32>
    %c4_152 = arith.constant 4 : index
    %c96_153 = arith.constant 96 : index
    %185 = vector.load %arg6[%c4_152, %c96_153] : memref<36x256xf32, #tpu.memory_space<vmem>>, vector<4x16xf32>
    tpu.vector_store %arg6[%c4_152, %c96_153], %184 {strides = array<i32>} : memref<36x256xf32, #tpu.memory_space<vmem>>, vector<4x16xf32>,
    %186 = vector.extract_strided_slice %29 {offsets = [0, 2], sizes = [4, 16], strides = [1, 1]} : vector<4x18xf32> to vector<4x16xf32>
    %c8_154 = arith.constant 8 : index
    %c96_155 = arith.constant 96 : index
    %187 = vector.load %arg6[%c8_154, %c96_155] : memref<36x256xf32, #tpu.memory_space<vmem>>, vector<4x16xf32>
    tpu.vector_store %arg6[%c8_154, %c96_155], %186 {strides = array<i32>} : memref<36x256xf32, #tpu.memory_space<vmem>>, vector<4x16xf32>,
    %188 = vector.extract_strided_slice %33 {offsets = [0, 0], sizes = [4, 16], strides = [1, 1]} : vector<4x18xf32> to vector<4x16xf32>
    %c12_156 = arith.constant 12 : index
    %c96_157 = arith.constant 96 : index
    %189 = vector.load %arg6[%c12_156, %c96_157] : memref<36x256xf32, #tpu.memory_space<vmem>>, vector<4x16xf32>
    tpu.vector_store %arg6[%c12_156, %c96_157], %188 {strides = array<i32>} : memref<36x256xf32, #tpu.memory_space<vmem>>, vector<4x16xf32>,
    %190 = vector.extract_strided_slice %33 {offsets = [0, 1], sizes = [4, 16], strides = [1, 1]} : vector<4x18xf32> to vector<4x16xf32>
    %c16_158 = arith.constant 16 : index
    %c96_159 = arith.constant 96 : index
    %191 = vector.load %arg6[%c16_158, %c96_159] : memref<36x256xf32, #tpu.memory_space<vmem>>, vector<4x16xf32>
    tpu.vector_store %arg6[%c16_158, %c96_159], %190 {strides = array<i32>} : memref<36x256xf32, #tpu.memory_space<vmem>>, vector<4x16xf32>,
    %192 = vector.extract_strided_slice %33 {offsets = [0, 2], sizes = [4, 16], strides = [1, 1]} : vector<4x18xf32> to vector<4x16xf32>
    %c20_160 = arith.constant 20 : index
    %c96_161 = arith.constant 96 : index
    %193 = vector.load %arg6[%c20_160, %c96_161] : memref<36x256xf32, #tpu.memory_space<vmem>>, vector<4x16xf32>
    tpu.vector_store %arg6[%c20_160, %c96_161], %192 {strides = array<i32>} : memref<36x256xf32, #tpu.memory_space<vmem>>, vector<4x16xf32>,
    %194 = vector.extract_strided_slice %37 {offsets = [0, 0], sizes = [4, 16], strides = [1, 1]} : vector<4x18xf32> to vector<4x16xf32>
    %c24_162 = arith.constant 24 : index
    %c96_163 = arith.constant 96 : index
    %195 = vector.load %arg6[%c24_162, %c96_163] : memref<36x256xf32, #tpu.memory_space<vmem>>, vector<4x16xf32>
    tpu.vector_store %arg6[%c24_162, %c96_163], %194 {strides = array<i32>} : memref<36x256xf32, #tpu.memory_space<vmem>>, vector<4x16xf32>,
    %196 = vector.extract_strided_slice %37 {offsets = [0, 1], sizes = [4, 16], strides = [1, 1]} : vector<4x18xf32> to vector<4x16xf32>
    %c28_164 = arith.constant 28 : index
    %c96_165 = arith.constant 96 : index
    %197 = vector.load %arg6[%c28_164, %c96_165] : memref<36x256xf32, #tpu.memory_space<vmem>>, vector<4x16xf32>
    tpu.vector_store %arg6[%c28_164, %c96_165], %196 {strides = array<i32>} : memref<36x256xf32, #tpu.memory_space<vmem>>, vector<4x16xf32>,
    %198 = vector.extract_strided_slice %37 {offsets = [0, 2], sizes = [4, 16], strides = [1, 1]} : vector<4x18xf32> to vector<4x16xf32>
    %c32_166 = arith.constant 32 : index
    %c96_167 = arith.constant 96 : index
    %199 = vector.load %arg6[%c32_166, %c96_167] : memref<36x256xf32, #tpu.memory_space<vmem>>, vector<4x16xf32>
    tpu.vector_store %arg6[%c32_166, %c96_167], %198 {strides = array<i32>} : memref<36x256xf32, #tpu.memory_space<vmem>>, vector<4x16xf32>,
    %200 = vector.extract_strided_slice %33 {offsets = [0, 0], sizes = [4, 16], strides = [1, 1]} : vector<4x18xf32> to vector<4x16xf32>
    %c0_168 = arith.constant 0 : index
    %c112 = arith.constant 112 : index
    %201 = vector.load %arg6[%c0_168, %c112] : memref<36x256xf32, #tpu.memory_space<vmem>>, vector<4x16xf32>
    tpu.vector_store %arg6[%c0_168, %c112], %200 {strides = array<i32>} : memref<36x256xf32, #tpu.memory_space<vmem>>, vector<4x16xf32>,
    %202 = vector.extract_strided_slice %33 {offsets = [0, 1], sizes = [4, 16], strides = [1, 1]} : vector<4x18xf32> to vector<4x16xf32>
    %c4_169 = arith.constant 4 : index
    %c112_170 = arith.constant 112 : index
    %203 = vector.load %arg6[%c4_169, %c112_170] : memref<36x256xf32, #tpu.memory_space<vmem>>, vector<4x16xf32>
    tpu.vector_store %arg6[%c4_169, %c112_170], %202 {strides = array<i32>} : memref<36x256xf32, #tpu.memory_space<vmem>>, vector<4x16xf32>,
    %204 = vector.extract_strided_slice %33 {offsets = [0, 2], sizes = [4, 16], strides = [1, 1]} : vector<4x18xf32> to vector<4x16xf32>
    %c8_171 = arith.constant 8 : index
    %c112_172 = arith.constant 112 : index
    %205 = vector.load %arg6[%c8_171, %c112_172] : memref<36x256xf32, #tpu.memory_space<vmem>>, vector<4x16xf32>
    tpu.vector_store %arg6[%c8_171, %c112_172], %204 {strides = array<i32>} : memref<36x256xf32, #tpu.memory_space<vmem>>, vector<4x16xf32>,
    %206 = vector.extract_strided_slice %37 {offsets = [0, 0], sizes = [4, 16], strides = [1, 1]} : vector<4x18xf32> to vector<4x16xf32>
    %c12_173 = arith.constant 12 : index
    %c112_174 = arith.constant 112 : index
    %207 = vector.load %arg6[%c12_173, %c112_174] : memref<36x256xf32, #tpu.memory_space<vmem>>, vector<4x16xf32>
    tpu.vector_store %arg6[%c12_173, %c112_174], %206 {strides = array<i32>} : memref<36x256xf32, #tpu.memory_space<vmem>>, vector<4x16xf32>,
    %208 = vector.extract_strided_slice %37 {offsets = [0, 1], sizes = [4, 16], strides = [1, 1]} : vector<4x18xf32> to vector<4x16xf32>
    %c16_175 = arith.constant 16 : index
    %c112_176 = arith.constant 112 : index
    %209 = vector.load %arg6[%c16_175, %c112_176] : memref<36x256xf32, #tpu.memory_space<vmem>>, vector<4x16xf32>
    tpu.vector_store %arg6[%c16_175, %c112_176], %208 {strides = array<i32>} : memref<36x256xf32, #tpu.memory_space<vmem>>, vector<4x16xf32>,
    %210 = vector.extract_strided_slice %37 {offsets = [0, 2], sizes = [4, 16], strides = [1, 1]} : vector<4x18xf32> to vector<4x16xf32>
    %c20_177 = arith.constant 20 : index
    %c112_178 = arith.constant 112 : index
    %211 = vector.load %arg6[%c20_177, %c112_178] : memref<36x256xf32, #tpu.memory_space<vmem>>, vector<4x16xf32>
    tpu.vector_store %arg6[%c20_177, %c112_178], %210 {strides = array<i32>} : memref<36x256xf32, #tpu.memory_space<vmem>>, vector<4x16xf32>,
    %212 = vector.extract_strided_slice %41 {offsets = [0, 0], sizes = [4, 16], strides = [1, 1]} : vector<4x18xf32> to vector<4x16xf32>
    %c24_179 = arith.constant 24 : index
    %c112_180 = arith.constant 112 : index
    %213 = vector.load %arg6[%c24_179, %c112_180] : memref<36x256xf32, #tpu.memory_space<vmem>>, vector<4x16xf32>
    tpu.vector_store %arg6[%c24_179, %c112_180], %212 {strides = array<i32>} : memref<36x256xf32, #tpu.memory_space<vmem>>, vector<4x16xf32>,
    %214 = vector.extract_strided_slice %41 {offsets = [0, 1], sizes = [4, 16], strides = [1, 1]} : vector<4x18xf32> to vector<4x16xf32>
    %c28_181 = arith.constant 28 : index
    %c112_182 = arith.constant 112 : index
    %215 = vector.load %arg6[%c28_181, %c112_182] : memref<36x256xf32, #tpu.memory_space<vmem>>, vector<4x16xf32>
    tpu.vector_store %arg6[%c28_181, %c112_182], %214 {strides = array<i32>} : memref<36x256xf32, #tpu.memory_space<vmem>>, vector<4x16xf32>,
    %216 = vector.extract_strided_slice %41 {offsets = [0, 2], sizes = [4, 16], strides = [1, 1]} : vector<4x18xf32> to vector<4x16xf32>
    %c32_183 = arith.constant 32 : index
    %c112_184 = arith.constant 112 : index
    %217 = vector.load %arg6[%c32_183, %c112_184] : memref<36x256xf32, #tpu.memory_space<vmem>>, vector<4x16xf32>
    tpu.vector_store %arg6[%c32_183, %c112_184], %216 {strides = array<i32>} : memref<36x256xf32, #tpu.memory_space<vmem>>, vector<4x16xf32>,
    %218 = vector.extract_strided_slice %37 {offsets = [0, 0], sizes = [4, 16], strides = [1, 1]} : vector<4x18xf32> to vector<4x16xf32>
    %c0_185 = arith.constant 0 : index
    %c128 = arith.constant 128 : index
    %219 = vector.load %arg6[%c0_185, %c128] : memref<36x256xf32, #tpu.memory_space<vmem>>, vector<4x16xf32>
    tpu.vector_store %arg6[%c0_185, %c128], %218 {strides = array<i32>} : memref<36x256xf32, #tpu.memory_space<vmem>>, vector<4x16xf32>,
    %220 = vector.extract_strided_slice %37 {offsets = [0, 1], sizes = [4, 16], strides = [1, 1]} : vector<4x18xf32> to vector<4x16xf32>
    %c4_186 = arith.constant 4 : index
    %c128_187 = arith.constant 128 : index
    %221 = vector.load %arg6[%c4_186, %c128_187] : memref<36x256xf32, #tpu.memory_space<vmem>>, vector<4x16xf32>
    tpu.vector_store %arg6[%c4_186, %c128_187], %220 {strides = array<i32>} : memref<36x256xf32, #tpu.memory_space<vmem>>, vector<4x16xf32>,
    %222 = vector.extract_strided_slice %37 {offsets = [0, 2], sizes = [4, 16], strides = [1, 1]} : vector<4x18xf32> to vector<4x16xf32>
    %c8_188 = arith.constant 8 : index
    %c128_189 = arith.constant 128 : index
    %223 = vector.load %arg6[%c8_188, %c128_189] : memref<36x256xf32, #tpu.memory_space<vmem>>, vector<4x16xf32>
    tpu.vector_store %arg6[%c8_188, %c128_189], %222 {strides = array<i32>} : memref<36x256xf32, #tpu.memory_space<vmem>>, vector<4x16xf32>,
    %224 = vector.extract_strided_slice %41 {offsets = [0, 0], sizes = [4, 16], strides = [1, 1]} : vector<4x18xf32> to vector<4x16xf32>
    %c12_190 = arith.constant 12 : index
    %c128_191 = arith.constant 128 : index
    %225 = vector.load %arg6[%c12_190, %c128_191] : memref<36x256xf32, #tpu.memory_space<vmem>>, vector<4x16xf32>
    tpu.vector_store %arg6[%c12_190, %c128_191], %224 {strides = array<i32>} : memref<36x256xf32, #tpu.memory_space<vmem>>, vector<4x16xf32>,
    %226 = vector.extract_strided_slice %41 {offsets = [0, 1], sizes = [4, 16], strides = [1, 1]} : vector<4x18xf32> to vector<4x16xf32>
    %c16_192 = arith.constant 16 : index
    %c128_193 = arith.constant 128 : index
    %227 = vector.load %arg6[%c16_192, %c128_193] : memref<36x256xf32, #tpu.memory_space<vmem>>, vector<4x16xf32>
    tpu.vector_store %arg6[%c16_192, %c128_193], %226 {strides = array<i32>} : memref<36x256xf32, #tpu.memory_space<vmem>>, vector<4x16xf32>,
    %228 = vector.extract_strided_slice %41 {offsets = [0, 2], sizes = [4, 16], strides = [1, 1]} : vector<4x18xf32> to vector<4x16xf32>
    %c20_194 = arith.constant 20 : index
    %c128_195 = arith.constant 128 : index
    %229 = vector.load %arg6[%c20_194, %c128_195] : memref<36x256xf32, #tpu.memory_space<vmem>>, vector<4x16xf32>
    tpu.vector_store %arg6[%c20_194, %c128_195], %228 {strides = array<i32>} : memref<36x256xf32, #tpu.memory_space<vmem>>, vector<4x16xf32>,
    %230 = vector.extract_strided_slice %45 {offsets = [0, 0], sizes = [4, 16], strides = [1, 1]} : vector<4x18xf32> to vector<4x16xf32>
    %c24_196 = arith.constant 24 : index
    %c128_197 = arith.constant 128 : index
    %231 = vector.load %arg6[%c24_196, %c128_197] : memref<36x256xf32, #tpu.memory_space<vmem>>, vector<4x16xf32>
    tpu.vector_store %arg6[%c24_196, %c128_197], %230 {strides = array<i32>} : memref<36x256xf32, #tpu.memory_space<vmem>>, vector<4x16xf32>,
    %232 = vector.extract_strided_slice %45 {offsets = [0, 1], sizes = [4, 16], strides = [1, 1]} : vector<4x18xf32> to vector<4x16xf32>
    %c28_198 = arith.constant 28 : index
    %c128_199 = arith.constant 128 : index
    %233 = vector.load %arg6[%c28_198, %c128_199] : memref<36x256xf32, #tpu.memory_space<vmem>>, vector<4x16xf32>
    tpu.vector_store %arg6[%c28_198, %c128_199], %232 {strides = array<i32>} : memref<36x256xf32, #tpu.memory_space<vmem>>, vector<4x16xf32>,
    %234 = vector.extract_strided_slice %45 {offsets = [0, 2], sizes = [4, 16], strides = [1, 1]} : vector<4x18xf32> to vector<4x16xf32>
    %c32_200 = arith.constant 32 : index
    %c128_201 = arith.constant 128 : index
    %235 = vector.load %arg6[%c32_200, %c128_201] : memref<36x256xf32, #tpu.memory_space<vmem>>, vector<4x16xf32>
    tpu.vector_store %arg6[%c32_200, %c128_201], %234 {strides = array<i32>} : memref<36x256xf32, #tpu.memory_space<vmem>>, vector<4x16xf32>,
    %236 = vector.extract_strided_slice %41 {offsets = [0, 0], sizes = [4, 16], strides = [1, 1]} : vector<4x18xf32> to vector<4x16xf32>
    %c0_202 = arith.constant 0 : index
    %c144 = arith.constant 144 : index
    %237 = vector.load %arg6[%c0_202, %c144] : memref<36x256xf32, #tpu.memory_space<vmem>>, vector<4x16xf32>
    tpu.vector_store %arg6[%c0_202, %c144], %236 {strides = array<i32>} : memref<36x256xf32, #tpu.memory_space<vmem>>, vector<4x16xf32>,
    %238 = vector.extract_strided_slice %41 {offsets = [0, 1], sizes = [4, 16], strides = [1, 1]} : vector<4x18xf32> to vector<4x16xf32>
    %c4_203 = arith.constant 4 : index
    %c144_204 = arith.constant 144 : index
    %239 = vector.load %arg6[%c4_203, %c144_204] : memref<36x256xf32, #tpu.memory_space<vmem>>, vector<4x16xf32>
    tpu.vector_store %arg6[%c4_203, %c144_204], %238 {strides = array<i32>} : memref<36x256xf32, #tpu.memory_space<vmem>>, vector<4x16xf32>,
    %240 = vector.extract_strided_slice %41 {offsets = [0, 2], sizes = [4, 16], strides = [1, 1]} : vector<4x18xf32> to vector<4x16xf32>
    %c8_205 = arith.constant 8 : index
    %c144_206 = arith.constant 144 : index
    %241 = vector.load %arg6[%c8_205, %c144_206] : memref<36x256xf32, #tpu.memory_space<vmem>>, vector<4x16xf32>
    tpu.vector_store %arg6[%c8_205, %c144_206], %240 {strides = array<i32>} : memref<36x256xf32, #tpu.memory_space<vmem>>, vector<4x16xf32>,
    %242 = vector.extract_strided_slice %45 {offsets = [0, 0], sizes = [4, 16], strides = [1, 1]} : vector<4x18xf32> to vector<4x16xf32>
    %c12_207 = arith.constant 12 : index
    %c144_208 = arith.constant 144 : index
    %243 = vector.load %arg6[%c12_207, %c144_208] : memref<36x256xf32, #tpu.memory_space<vmem>>, vector<4x16xf32>
    tpu.vector_store %arg6[%c12_207, %c144_208], %242 {strides = array<i32>} : memref<36x256xf32, #tpu.memory_space<vmem>>, vector<4x16xf32>,
    %244 = vector.extract_strided_slice %45 {offsets = [0, 1], sizes = [4, 16], strides = [1, 1]} : vector<4x18xf32> to vector<4x16xf32>
    %c16_209 = arith.constant 16 : index
    %c144_210 = arith.constant 144 : index
    %245 = vector.load %arg6[%c16_209, %c144_210] : memref<36x256xf32, #tpu.memory_space<vmem>>, vector<4x16xf32>
    tpu.vector_store %arg6[%c16_209, %c144_210], %244 {strides = array<i32>} : memref<36x256xf32, #tpu.memory_space<vmem>>, vector<4x16xf32>,
    %246 = vector.extract_strided_slice %45 {offsets = [0, 2], sizes = [4, 16], strides = [1, 1]} : vector<4x18xf32> to vector<4x16xf32>
    %c20_211 = arith.constant 20 : index
    %c144_212 = arith.constant 144 : index
    %247 = vector.load %arg6[%c20_211, %c144_212] : memref<36x256xf32, #tpu.memory_space<vmem>>, vector<4x16xf32>
    tpu.vector_store %arg6[%c20_211, %c144_212], %246 {strides = array<i32>} : memref<36x256xf32, #tpu.memory_space<vmem>>, vector<4x16xf32>,
    %248 = vector.extract_strided_slice %49 {offsets = [0, 0], sizes = [4, 16], strides = [1, 1]} : vector<4x18xf32> to vector<4x16xf32>
    %c24_213 = arith.constant 24 : index
    %c144_214 = arith.constant 144 : index
    %249 = vector.load %arg6[%c24_213, %c144_214] : memref<36x256xf32, #tpu.memory_space<vmem>>, vector<4x16xf32>
    tpu.vector_store %arg6[%c24_213, %c144_214], %248 {strides = array<i32>} : memref<36x256xf32, #tpu.memory_space<vmem>>, vector<4x16xf32>,
    %250 = vector.extract_strided_slice %49 {offsets = [0, 1], sizes = [4, 16], strides = [1, 1]} : vector<4x18xf32> to vector<4x16xf32>
    %c28_215 = arith.constant 28 : index
    %c144_216 = arith.constant 144 : index
    %251 = vector.load %arg6[%c28_215, %c144_216] : memref<36x256xf32, #tpu.memory_space<vmem>>, vector<4x16xf32>
    tpu.vector_store %arg6[%c28_215, %c144_216], %250 {strides = array<i32>} : memref<36x256xf32, #tpu.memory_space<vmem>>, vector<4x16xf32>,
    %252 = vector.extract_strided_slice %49 {offsets = [0, 2], sizes = [4, 16], strides = [1, 1]} : vector<4x18xf32> to vector<4x16xf32>
    %c32_217 = arith.constant 32 : index
    %c144_218 = arith.constant 144 : index
    %253 = vector.load %arg6[%c32_217, %c144_218] : memref<36x256xf32, #tpu.memory_space<vmem>>, vector<4x16xf32>
    tpu.vector_store %arg6[%c32_217, %c144_218], %252 {strides = array<i32>} : memref<36x256xf32, #tpu.memory_space<vmem>>, vector<4x16xf32>,
    %254 = vector.extract_strided_slice %45 {offsets = [0, 0], sizes = [4, 16], strides = [1, 1]} : vector<4x18xf32> to vector<4x16xf32>
    %c0_219 = arith.constant 0 : index
    %c160 = arith.constant 160 : index
    %255 = vector.load %arg6[%c0_219, %c160] : memref<36x256xf32, #tpu.memory_space<vmem>>, vector<4x16xf32>
    tpu.vector_store %arg6[%c0_219, %c160], %254 {strides = array<i32>} : memref<36x256xf32, #tpu.memory_space<vmem>>, vector<4x16xf32>,
    %256 = vector.extract_strided_slice %45 {offsets = [0, 1], sizes = [4, 16], strides = [1, 1]} : vector<4x18xf32> to vector<4x16xf32>
    %c4_220 = arith.constant 4 : index
    %c160_221 = arith.constant 160 : index
    %257 = vector.load %arg6[%c4_220, %c160_221] : memref<36x256xf32, #tpu.memory_space<vmem>>, vector<4x16xf32>
    tpu.vector_store %arg6[%c4_220, %c160_221], %256 {strides = array<i32>} : memref<36x256xf32, #tpu.memory_space<vmem>>, vector<4x16xf32>,
    %258 = vector.extract_strided_slice %45 {offsets = [0, 2], sizes = [4, 16], strides = [1, 1]} : vector<4x18xf32> to vector<4x16xf32>
    %c8_222 = arith.constant 8 : index
    %c160_223 = arith.constant 160 : index
    %259 = vector.load %arg6[%c8_222, %c160_223] : memref<36x256xf32, #tpu.memory_space<vmem>>, vector<4x16xf32>
    tpu.vector_store %arg6[%c8_222, %c160_223], %258 {strides = array<i32>} : memref<36x256xf32, #tpu.memory_space<vmem>>, vector<4x16xf32>,
    %260 = vector.extract_strided_slice %49 {offsets = [0, 0], sizes = [4, 16], strides = [1, 1]} : vector<4x18xf32> to vector<4x16xf32>
    %c12_224 = arith.constant 12 : index
    %c160_225 = arith.constant 160 : index
    %261 = vector.load %arg6[%c12_224, %c160_225] : memref<36x256xf32, #tpu.memory_space<vmem>>, vector<4x16xf32>
    tpu.vector_store %arg6[%c12_224, %c160_225], %260 {strides = array<i32>} : memref<36x256xf32, #tpu.memory_space<vmem>>, vector<4x16xf32>,
    %262 = vector.extract_strided_slice %49 {offsets = [0, 1], sizes = [4, 16], strides = [1, 1]} : vector<4x18xf32> to vector<4x16xf32>
    %c16_226 = arith.constant 16 : index
    %c160_227 = arith.constant 160 : index
    %263 = vector.load %arg6[%c16_226, %c160_227] : memref<36x256xf32, #tpu.memory_space<vmem>>, vector<4x16xf32>
    tpu.vector_store %arg6[%c16_226, %c160_227], %262 {strides = array<i32>} : memref<36x256xf32, #tpu.memory_space<vmem>>, vector<4x16xf32>,
    %264 = vector.extract_strided_slice %49 {offsets = [0, 2], sizes = [4, 16], strides = [1, 1]} : vector<4x18xf32> to vector<4x16xf32>
    %c20_228 = arith.constant 20 : index
    %c160_229 = arith.constant 160 : index
    %265 = vector.load %arg6[%c20_228, %c160_229] : memref<36x256xf32, #tpu.memory_space<vmem>>, vector<4x16xf32>
    tpu.vector_store %arg6[%c20_228, %c160_229], %264 {strides = array<i32>} : memref<36x256xf32, #tpu.memory_space<vmem>>, vector<4x16xf32>,
    %266 = vector.extract_strided_slice %53 {offsets = [0, 0], sizes = [4, 16], strides = [1, 1]} : vector<4x18xf32> to vector<4x16xf32>
    %c24_230 = arith.constant 24 : index
    %c160_231 = arith.constant 160 : index
    %267 = vector.load %arg6[%c24_230, %c160_231] : memref<36x256xf32, #tpu.memory_space<vmem>>, vector<4x16xf32>
    tpu.vector_store %arg6[%c24_230, %c160_231], %266 {strides = array<i32>} : memref<36x256xf32, #tpu.memory_space<vmem>>, vector<4x16xf32>,
    %268 = vector.extract_strided_slice %53 {offsets = [0, 1], sizes = [4, 16], strides = [1, 1]} : vector<4x18xf32> to vector<4x16xf32>
    %c28_232 = arith.constant 28 : index
    %c160_233 = arith.constant 160 : index
    %269 = vector.load %arg6[%c28_232, %c160_233] : memref<36x256xf32, #tpu.memory_space<vmem>>, vector<4x16xf32>
    tpu.vector_store %arg6[%c28_232, %c160_233], %268 {strides = array<i32>} : memref<36x256xf32, #tpu.memory_space<vmem>>, vector<4x16xf32>,
    %270 = vector.extract_strided_slice %53 {offsets = [0, 2], sizes = [4, 16], strides = [1, 1]} : vector<4x18xf32> to vector<4x16xf32>
    %c32_234 = arith.constant 32 : index
    %c160_235 = arith.constant 160 : index
    %271 = vector.load %arg6[%c32_234, %c160_235] : memref<36x256xf32, #tpu.memory_space<vmem>>, vector<4x16xf32>
    tpu.vector_store %arg6[%c32_234, %c160_235], %270 {strides = array<i32>} : memref<36x256xf32, #tpu.memory_space<vmem>>, vector<4x16xf32>,
    %272 = vector.extract_strided_slice %49 {offsets = [0, 0], sizes = [4, 16], strides = [1, 1]} : vector<4x18xf32> to vector<4x16xf32>
    %c0_236 = arith.constant 0 : index
    %c176 = arith.constant 176 : index
    %273 = vector.load %arg6[%c0_236, %c176] : memref<36x256xf32, #tpu.memory_space<vmem>>, vector<4x16xf32>
    tpu.vector_store %arg6[%c0_236, %c176], %272 {strides = array<i32>} : memref<36x256xf32, #tpu.memory_space<vmem>>, vector<4x16xf32>,
    %274 = vector.extract_strided_slice %49 {offsets = [0, 1], sizes = [4, 16], strides = [1, 1]} : vector<4x18xf32> to vector<4x16xf32>
    %c4_237 = arith.constant 4 : index
    %c176_238 = arith.constant 176 : index
    %275 = vector.load %arg6[%c4_237, %c176_238] : memref<36x256xf32, #tpu.memory_space<vmem>>, vector<4x16xf32>
    tpu.vector_store %arg6[%c4_237, %c176_238], %274 {strides = array<i32>} : memref<36x256xf32, #tpu.memory_space<vmem>>, vector<4x16xf32>,
    %276 = vector.extract_strided_slice %49 {offsets = [0, 2], sizes = [4, 16], strides = [1, 1]} : vector<4x18xf32> to vector<4x16xf32>
    %c8_239 = arith.constant 8 : index
    %c176_240 = arith.constant 176 : index
    %277 = vector.load %arg6[%c8_239, %c176_240] : memref<36x256xf32, #tpu.memory_space<vmem>>, vector<4x16xf32>
    tpu.vector_store %arg6[%c8_239, %c176_240], %276 {strides = array<i32>} : memref<36x256xf32, #tpu.memory_space<vmem>>, vector<4x16xf32>,
    %278 = vector.extract_strided_slice %53 {offsets = [0, 0], sizes = [4, 16], strides = [1, 1]} : vector<4x18xf32> to vector<4x16xf32>
    %c12_241 = arith.constant 12 : index
    %c176_242 = arith.constant 176 : index
    %279 = vector.load %arg6[%c12_241, %c176_242] : memref<36x256xf32, #tpu.memory_space<vmem>>, vector<4x16xf32>
    tpu.vector_store %arg6[%c12_241, %c176_242], %278 {strides = array<i32>} : memref<36x256xf32, #tpu.memory_space<vmem>>, vector<4x16xf32>,
    %280 = vector.extract_strided_slice %53 {offsets = [0, 1], sizes = [4, 16], strides = [1, 1]} : vector<4x18xf32> to vector<4x16xf32>
    %c16_243 = arith.constant 16 : index
    %c176_244 = arith.constant 176 : index
    %281 = vector.load %arg6[%c16_243, %c176_244] : memref<36x256xf32, #tpu.memory_space<vmem>>, vector<4x16xf32>
    tpu.vector_store %arg6[%c16_243, %c176_244], %280 {strides = array<i32>} : memref<36x256xf32, #tpu.memory_space<vmem>>, vector<4x16xf32>,
    %282 = vector.extract_strided_slice %53 {offsets = [0, 2], sizes = [4, 16], strides = [1, 1]} : vector<4x18xf32> to vector<4x16xf32>
    %c20_245 = arith.constant 20 : index
    %c176_246 = arith.constant 176 : index
    %283 = vector.load %arg6[%c20_245, %c176_246] : memref<36x256xf32, #tpu.memory_space<vmem>>, vector<4x16xf32>
    tpu.vector_store %arg6[%c20_245, %c176_246], %282 {strides = array<i32>} : memref<36x256xf32, #tpu.memory_space<vmem>>, vector<4x16xf32>,
    %284 = vector.extract_strided_slice %57 {offsets = [0, 0], sizes = [4, 16], strides = [1, 1]} : vector<4x18xf32> to vector<4x16xf32>
    %c24_247 = arith.constant 24 : index
    %c176_248 = arith.constant 176 : index
    %285 = vector.load %arg6[%c24_247, %c176_248] : memref<36x256xf32, #tpu.memory_space<vmem>>, vector<4x16xf32>
    tpu.vector_store %arg6[%c24_247, %c176_248], %284 {strides = array<i32>} : memref<36x256xf32, #tpu.memory_space<vmem>>, vector<4x16xf32>,
    %286 = vector.extract_strided_slice %57 {offsets = [0, 1], sizes = [4, 16], strides = [1, 1]} : vector<4x18xf32> to vector<4x16xf32>
    %c28_249 = arith.constant 28 : index
    %c176_250 = arith.constant 176 : index
    %287 = vector.load %arg6[%c28_249, %c176_250] : memref<36x256xf32, #tpu.memory_space<vmem>>, vector<4x16xf32>
    tpu.vector_store %arg6[%c28_249, %c176_250], %286 {strides = array<i32>} : memref<36x256xf32, #tpu.memory_space<vmem>>, vector<4x16xf32>,
    %288 = vector.extract_strided_slice %57 {offsets = [0, 2], sizes = [4, 16], strides = [1, 1]} : vector<4x18xf32> to vector<4x16xf32>
    %c32_251 = arith.constant 32 : index
    %c176_252 = arith.constant 176 : index
    %289 = vector.load %arg6[%c32_251, %c176_252] : memref<36x256xf32, #tpu.memory_space<vmem>>, vector<4x16xf32>
    tpu.vector_store %arg6[%c32_251, %c176_252], %288 {strides = array<i32>} : memref<36x256xf32, #tpu.memory_space<vmem>>, vector<4x16xf32>,
    %290 = vector.extract_strided_slice %53 {offsets = [0, 0], sizes = [4, 16], strides = [1, 1]} : vector<4x18xf32> to vector<4x16xf32>
    %c0_253 = arith.constant 0 : index
    %c192 = arith.constant 192 : index
    %291 = vector.load %arg6[%c0_253, %c192] : memref<36x256xf32, #tpu.memory_space<vmem>>, vector<4x16xf32>
    tpu.vector_store %arg6[%c0_253, %c192], %290 {strides = array<i32>} : memref<36x256xf32, #tpu.memory_space<vmem>>, vector<4x16xf32>,
    %292 = vector.extract_strided_slice %53 {offsets = [0, 1], sizes = [4, 16], strides = [1, 1]} : vector<4x18xf32> to vector<4x16xf32>
    %c4_254 = arith.constant 4 : index
    %c192_255 = arith.constant 192 : index
    %293 = vector.load %arg6[%c4_254, %c192_255] : memref<36x256xf32, #tpu.memory_space<vmem>>, vector<4x16xf32>
    tpu.vector_store %arg6[%c4_254, %c192_255], %292 {strides = array<i32>} : memref<36x256xf32, #tpu.memory_space<vmem>>, vector<4x16xf32>,
    %294 = vector.extract_strided_slice %53 {offsets = [0, 2], sizes = [4, 16], strides = [1, 1]} : vector<4x18xf32> to vector<4x16xf32>
    %c8_256 = arith.constant 8 : index
    %c192_257 = arith.constant 192 : index
    %295 = vector.load %arg6[%c8_256, %c192_257] : memref<36x256xf32, #tpu.memory_space<vmem>>, vector<4x16xf32>
    tpu.vector_store %arg6[%c8_256, %c192_257], %294 {strides = array<i32>} : memref<36x256xf32, #tpu.memory_space<vmem>>, vector<4x16xf32>,
    %296 = vector.extract_strided_slice %57 {offsets = [0, 0], sizes = [4, 16], strides = [1, 1]} : vector<4x18xf32> to vector<4x16xf32>
    %c12_258 = arith.constant 12 : index
    %c192_259 = arith.constant 192 : index
    %297 = vector.load %arg6[%c12_258, %c192_259] : memref<36x256xf32, #tpu.memory_space<vmem>>, vector<4x16xf32>
    tpu.vector_store %arg6[%c12_258, %c192_259], %296 {strides = array<i32>} : memref<36x256xf32, #tpu.memory_space<vmem>>, vector<4x16xf32>,
    %298 = vector.extract_strided_slice %57 {offsets = [0, 1], sizes = [4, 16], strides = [1, 1]} : vector<4x18xf32> to vector<4x16xf32>
    %c16_260 = arith.constant 16 : index
    %c192_261 = arith.constant 192 : index
    %299 = vector.load %arg6[%c16_260, %c192_261] : memref<36x256xf32, #tpu.memory_space<vmem>>, vector<4x16xf32>
    tpu.vector_store %arg6[%c16_260, %c192_261], %298 {strides = array<i32>} : memref<36x256xf32, #tpu.memory_space<vmem>>, vector<4x16xf32>,
    %300 = vector.extract_strided_slice %57 {offsets = [0, 2], sizes = [4, 16], strides = [1, 1]} : vector<4x18xf32> to vector<4x16xf32>
    %c20_262 = arith.constant 20 : index
    %c192_263 = arith.constant 192 : index
    %301 = vector.load %arg6[%c20_262, %c192_263] : memref<36x256xf32, #tpu.memory_space<vmem>>, vector<4x16xf32>
    tpu.vector_store %arg6[%c20_262, %c192_263], %300 {strides = array<i32>} : memref<36x256xf32, #tpu.memory_space<vmem>>, vector<4x16xf32>,
    %302 = vector.extract_strided_slice %61 {offsets = [0, 0], sizes = [4, 16], strides = [1, 1]} : vector<4x18xf32> to vector<4x16xf32>
    %c24_264 = arith.constant 24 : index
    %c192_265 = arith.constant 192 : index
    %303 = vector.load %arg6[%c24_264, %c192_265] : memref<36x256xf32, #tpu.memory_space<vmem>>, vector<4x16xf32>
    tpu.vector_store %arg6[%c24_264, %c192_265], %302 {strides = array<i32>} : memref<36x256xf32, #tpu.memory_space<vmem>>, vector<4x16xf32>,
    %304 = vector.extract_strided_slice %61 {offsets = [0, 1], sizes = [4, 16], strides = [1, 1]} : vector<4x18xf32> to vector<4x16xf32>
    %c28_266 = arith.constant 28 : index
    %c192_267 = arith.constant 192 : index
    %305 = vector.load %arg6[%c28_266, %c192_267] : memref<36x256xf32, #tpu.memory_space<vmem>>, vector<4x16xf32>
    tpu.vector_store %arg6[%c28_266, %c192_267], %304 {strides = array<i32>} : memref<36x256xf32, #tpu.memory_space<vmem>>, vector<4x16xf32>,
    %306 = vector.extract_strided_slice %61 {offsets = [0, 2], sizes = [4, 16], strides = [1, 1]} : vector<4x18xf32> to vector<4x16xf32>
    %c32_268 = arith.constant 32 : index
    %c192_269 = arith.constant 192 : index
    %307 = vector.load %arg6[%c32_268, %c192_269] : memref<36x256xf32, #tpu.memory_space<vmem>>, vector<4x16xf32>
    tpu.vector_store %arg6[%c32_268, %c192_269], %306 {strides = array<i32>} : memref<36x256xf32, #tpu.memory_space<vmem>>, vector<4x16xf32>,
    %308 = vector.extract_strided_slice %57 {offsets = [0, 0], sizes = [4, 16], strides = [1, 1]} : vector<4x18xf32> to vector<4x16xf32>
    %c0_270 = arith.constant 0 : index
    %c208 = arith.constant 208 : index
    %309 = vector.load %arg6[%c0_270, %c208] : memref<36x256xf32, #tpu.memory_space<vmem>>, vector<4x16xf32>
    tpu.vector_store %arg6[%c0_270, %c208], %308 {strides = array<i32>} : memref<36x256xf32, #tpu.memory_space<vmem>>, vector<4x16xf32>,
    %310 = vector.extract_strided_slice %57 {offsets = [0, 1], sizes = [4, 16], strides = [1, 1]} : vector<4x18xf32> to vector<4x16xf32>
    %c4_271 = arith.constant 4 : index
    %c208_272 = arith.constant 208 : index
    %311 = vector.load %arg6[%c4_271, %c208_272] : memref<36x256xf32, #tpu.memory_space<vmem>>, vector<4x16xf32>
    tpu.vector_store %arg6[%c4_271, %c208_272], %310 {strides = array<i32>} : memref<36x256xf32, #tpu.memory_space<vmem>>, vector<4x16xf32>,
    %312 = vector.extract_strided_slice %57 {offsets = [0, 2], sizes = [4, 16], strides = [1, 1]} : vector<4x18xf32> to vector<4x16xf32>
    %c8_273 = arith.constant 8 : index
    %c208_274 = arith.constant 208 : index
    %313 = vector.load %arg6[%c8_273, %c208_274] : memref<36x256xf32, #tpu.memory_space<vmem>>, vector<4x16xf32>
    tpu.vector_store %arg6[%c8_273, %c208_274], %312 {strides = array<i32>} : memref<36x256xf32, #tpu.memory_space<vmem>>, vector<4x16xf32>,
    %314 = vector.extract_strided_slice %61 {offsets = [0, 0], sizes = [4, 16], strides = [1, 1]} : vector<4x18xf32> to vector<4x16xf32>
    %c12_275 = arith.constant 12 : index
    %c208_276 = arith.constant 208 : index
    %315 = vector.load %arg6[%c12_275, %c208_276] : memref<36x256xf32, #tpu.memory_space<vmem>>, vector<4x16xf32>
    tpu.vector_store %arg6[%c12_275, %c208_276], %314 {strides = array<i32>} : memref<36x256xf32, #tpu.memory_space<vmem>>, vector<4x16xf32>,
    %316 = vector.extract_strided_slice %61 {offsets = [0, 1], sizes = [4, 16], strides = [1, 1]} : vector<4x18xf32> to vector<4x16xf32>
    %c16_277 = arith.constant 16 : index
    %c208_278 = arith.constant 208 : index
    %317 = vector.load %arg6[%c16_277, %c208_278] : memref<36x256xf32, #tpu.memory_space<vmem>>, vector<4x16xf32>
    tpu.vector_store %arg6[%c16_277, %c208_278], %316 {strides = array<i32>} : memref<36x256xf32, #tpu.memory_space<vmem>>, vector<4x16xf32>,
    %318 = vector.extract_strided_slice %61 {offsets = [0, 2], sizes = [4, 16], strides = [1, 1]} : vector<4x18xf32> to vector<4x16xf32>
    %c20_279 = arith.constant 20 : index
    %c208_280 = arith.constant 208 : index
    %319 = vector.load %arg6[%c20_279, %c208_280] : memref<36x256xf32, #tpu.memory_space<vmem>>, vector<4x16xf32>
    tpu.vector_store %arg6[%c20_279, %c208_280], %318 {strides = array<i32>} : memref<36x256xf32, #tpu.memory_space<vmem>>, vector<4x16xf32>,
    %320 = vector.extract_strided_slice %65 {offsets = [0, 0], sizes = [4, 16], strides = [1, 1]} : vector<4x18xf32> to vector<4x16xf32>
    %c24_281 = arith.constant 24 : index
    %c208_282 = arith.constant 208 : index
    %321 = vector.load %arg6[%c24_281, %c208_282] : memref<36x256xf32, #tpu.memory_space<vmem>>, vector<4x16xf32>
    tpu.vector_store %arg6[%c24_281, %c208_282], %320 {strides = array<i32>} : memref<36x256xf32, #tpu.memory_space<vmem>>, vector<4x16xf32>,
    %322 = vector.extract_strided_slice %65 {offsets = [0, 1], sizes = [4, 16], strides = [1, 1]} : vector<4x18xf32> to vector<4x16xf32>
    %c28_283 = arith.constant 28 : index
    %c208_284 = arith.constant 208 : index
    %323 = vector.load %arg6[%c28_283, %c208_284] : memref<36x256xf32, #tpu.memory_space<vmem>>, vector<4x16xf32>
    tpu.vector_store %arg6[%c28_283, %c208_284], %322 {strides = array<i32>} : memref<36x256xf32, #tpu.memory_space<vmem>>, vector<4x16xf32>,
    %324 = vector.extract_strided_slice %65 {offsets = [0, 2], sizes = [4, 16], strides = [1, 1]} : vector<4x18xf32> to vector<4x16xf32>
    %c32_285 = arith.constant 32 : index
    %c208_286 = arith.constant 208 : index
    %325 = vector.load %arg6[%c32_285, %c208_286] : memref<36x256xf32, #tpu.memory_space<vmem>>, vector<4x16xf32>
    tpu.vector_store %arg6[%c32_285, %c208_286], %324 {strides = array<i32>} : memref<36x256xf32, #tpu.memory_space<vmem>>, vector<4x16xf32>,
    %326 = vector.extract_strided_slice %61 {offsets = [0, 0], sizes = [4, 16], strides = [1, 1]} : vector<4x18xf32> to vector<4x16xf32>
    %c0_287 = arith.constant 0 : index
    %c224 = arith.constant 224 : index
    %327 = vector.load %arg6[%c0_287, %c224] : memref<36x256xf32, #tpu.memory_space<vmem>>, vector<4x16xf32>
    tpu.vector_store %arg6[%c0_287, %c224], %326 {strides = array<i32>} : memref<36x256xf32, #tpu.memory_space<vmem>>, vector<4x16xf32>,
    %328 = vector.extract_strided_slice %61 {offsets = [0, 1], sizes = [4, 16], strides = [1, 1]} : vector<4x18xf32> to vector<4x16xf32>
    %c4_288 = arith.constant 4 : index
    %c224_289 = arith.constant 224 : index
    %329 = vector.load %arg6[%c4_288, %c224_289] : memref<36x256xf32, #tpu.memory_space<vmem>>, vector<4x16xf32>
    tpu.vector_store %arg6[%c4_288, %c224_289], %328 {strides = array<i32>} : memref<36x256xf32, #tpu.memory_space<vmem>>, vector<4x16xf32>,
    %330 = vector.extract_strided_slice %61 {offsets = [0, 2], sizes = [4, 16], strides = [1, 1]} : vector<4x18xf32> to vector<4x16xf32>
    %c8_290 = arith.constant 8 : index
    %c224_291 = arith.constant 224 : index
    %331 = vector.load %arg6[%c8_290, %c224_291] : memref<36x256xf32, #tpu.memory_space<vmem>>, vector<4x16xf32>
    tpu.vector_store %arg6[%c8_290, %c224_291], %330 {strides = array<i32>} : memref<36x256xf32, #tpu.memory_space<vmem>>, vector<4x16xf32>,
    %332 = vector.extract_strided_slice %65 {offsets = [0, 0], sizes = [4, 16], strides = [1, 1]} : vector<4x18xf32> to vector<4x16xf32>
    %c12_292 = arith.constant 12 : index
    %c224_293 = arith.constant 224 : index
    %333 = vector.load %arg6[%c12_292, %c224_293] : memref<36x256xf32, #tpu.memory_space<vmem>>, vector<4x16xf32>
    tpu.vector_store %arg6[%c12_292, %c224_293], %332 {strides = array<i32>} : memref<36x256xf32, #tpu.memory_space<vmem>>, vector<4x16xf32>,
    %334 = vector.extract_strided_slice %65 {offsets = [0, 1], sizes = [4, 16], strides = [1, 1]} : vector<4x18xf32> to vector<4x16xf32>
    %c16_294 = arith.constant 16 : index
    %c224_295 = arith.constant 224 : index
    %335 = vector.load %arg6[%c16_294, %c224_295] : memref<36x256xf32, #tpu.memory_space<vmem>>, vector<4x16xf32>
    tpu.vector_store %arg6[%c16_294, %c224_295], %334 {strides = array<i32>} : memref<36x256xf32, #tpu.memory_space<vmem>>, vector<4x16xf32>,
    %336 = vector.extract_strided_slice %65 {offsets = [0, 2], sizes = [4, 16], strides = [1, 1]} : vector<4x18xf32> to vector<4x16xf32>
    %c20_296 = arith.constant 20 : index
    %c224_297 = arith.constant 224 : index
    %337 = vector.load %arg6[%c20_296, %c224_297] : memref<36x256xf32, #tpu.memory_space<vmem>>, vector<4x16xf32>
    tpu.vector_store %arg6[%c20_296, %c224_297], %336 {strides = array<i32>} : memref<36x256xf32, #tpu.memory_space<vmem>>, vector<4x16xf32>,
    %338 = vector.extract_strided_slice %69 {offsets = [0, 0], sizes = [4, 16], strides = [1, 1]} : vector<4x18xf32> to vector<4x16xf32>
    %c24_298 = arith.constant 24 : index
    %c224_299 = arith.constant 224 : index
    %339 = vector.load %arg6[%c24_298, %c224_299] : memref<36x256xf32, #tpu.memory_space<vmem>>, vector<4x16xf32>
    tpu.vector_store %arg6[%c24_298, %c224_299], %338 {strides = array<i32>} : memref<36x256xf32, #tpu.memory_space<vmem>>, vector<4x16xf32>,
    %340 = vector.extract_strided_slice %69 {offsets = [0, 1], sizes = [4, 16], strides = [1, 1]} : vector<4x18xf32> to vector<4x16xf32>
    %c28_300 = arith.constant 28 : index
    %c224_301 = arith.constant 224 : index
    %341 = vector.load %arg6[%c28_300, %c224_301] : memref<36x256xf32, #tpu.memory_space<vmem>>, vector<4x16xf32>
    tpu.vector_store %arg6[%c28_300, %c224_301], %340 {strides = array<i32>} : memref<36x256xf32, #tpu.memory_space<vmem>>, vector<4x16xf32>,
    %342 = vector.extract_strided_slice %69 {offsets = [0, 2], sizes = [4, 16], strides = [1, 1]} : vector<4x18xf32> to vector<4x16xf32>
    %c32_302 = arith.constant 32 : index
    %c224_303 = arith.constant 224 : index
    %343 = vector.load %arg6[%c32_302, %c224_303] : memref<36x256xf32, #tpu.memory_space<vmem>>, vector<4x16xf32>
    tpu.vector_store %arg6[%c32_302, %c224_303], %342 {strides = array<i32>} : memref<36x256xf32, #tpu.memory_space<vmem>>, vector<4x16xf32>,
    %344 = vector.extract_strided_slice %65 {offsets = [0, 0], sizes = [4, 16], strides = [1, 1]} : vector<4x18xf32> to vector<4x16xf32>
    %c0_304 = arith.constant 0 : index
    %c240 = arith.constant 240 : index
    %345 = vector.load %arg6[%c0_304, %c240] : memref<36x256xf32, #tpu.memory_space<vmem>>, vector<4x16xf32>
    tpu.vector_store %arg6[%c0_304, %c240], %344 {strides = array<i32>} : memref<36x256xf32, #tpu.memory_space<vmem>>, vector<4x16xf32>,
    %346 = vector.extract_strided_slice %65 {offsets = [0, 1], sizes = [4, 16], strides = [1, 1]} : vector<4x18xf32> to vector<4x16xf32>
    %c4_305 = arith.constant 4 : index
    %c240_306 = arith.constant 240 : index
    %347 = vector.load %arg6[%c4_305, %c240_306] : memref<36x256xf32, #tpu.memory_space<vmem>>, vector<4x16xf32>
    tpu.vector_store %arg6[%c4_305, %c240_306], %346 {strides = array<i32>} : memref<36x256xf32, #tpu.memory_space<vmem>>, vector<4x16xf32>,
    %348 = vector.extract_strided_slice %65 {offsets = [0, 2], sizes = [4, 16], strides = [1, 1]} : vector<4x18xf32> to vector<4x16xf32>
    %c8_307 = arith.constant 8 : index
    %c240_308 = arith.constant 240 : index
    %349 = vector.load %arg6[%c8_307, %c240_308] : memref<36x256xf32, #tpu.memory_space<vmem>>, vector<4x16xf32>
    tpu.vector_store %arg6[%c8_307, %c240_308], %348 {strides = array<i32>} : memref<36x256xf32, #tpu.memory_space<vmem>>, vector<4x16xf32>,
    %350 = vector.extract_strided_slice %69 {offsets = [0, 0], sizes = [4, 16], strides = [1, 1]} : vector<4x18xf32> to vector<4x16xf32>
    %c12_309 = arith.constant 12 : index
    %c240_310 = arith.constant 240 : index
    %351 = vector.load %arg6[%c12_309, %c240_310] : memref<36x256xf32, #tpu.memory_space<vmem>>, vector<4x16xf32>
    tpu.vector_store %arg6[%c12_309, %c240_310], %350 {strides = array<i32>} : memref<36x256xf32, #tpu.memory_space<vmem>>, vector<4x16xf32>,
    %352 = vector.extract_strided_slice %69 {offsets = [0, 1], sizes = [4, 16], strides = [1, 1]} : vector<4x18xf32> to vector<4x16xf32>
    %c16_311 = arith.constant 16 : index
    %c240_312 = arith.constant 240 : index
    %353 = vector.load %arg6[%c16_311, %c240_312] : memref<36x256xf32, #tpu.memory_space<vmem>>, vector<4x16xf32>
    tpu.vector_store %arg6[%c16_311, %c240_312], %352 {strides = array<i32>} : memref<36x256xf32, #tpu.memory_space<vmem>>, vector<4x16xf32>,
    %354 = vector.extract_strided_slice %69 {offsets = [0, 2], sizes = [4, 16], strides = [1, 1]} : vector<4x18xf32> to vector<4x16xf32>
    %c20_313 = arith.constant 20 : index
    %c240_314 = arith.constant 240 : index
    %355 = vector.load %arg6[%c20_313, %c240_314] : memref<36x256xf32, #tpu.memory_space<vmem>>, vector<4x16xf32>
    tpu.vector_store %arg6[%c20_313, %c240_314], %354 {strides = array<i32>} : memref<36x256xf32, #tpu.memory_space<vmem>>, vector<4x16xf32>,
    %356 = vector.extract_strided_slice %73 {offsets = [0, 0], sizes = [4, 16], strides = [1, 1]} : vector<4x18xf32> to vector<4x16xf32>
    %c24_315 = arith.constant 24 : index
    %c240_316 = arith.constant 240 : index
    %357 = vector.load %arg6[%c24_315, %c240_316] : memref<36x256xf32, #tpu.memory_space<vmem>>, vector<4x16xf32>
    tpu.vector_store %arg6[%c24_315, %c240_316], %356 {strides = array<i32>} : memref<36x256xf32, #tpu.memory_space<vmem>>, vector<4x16xf32>,
    %358 = vector.extract_strided_slice %73 {offsets = [0, 1], sizes = [4, 16], strides = [1, 1]} : vector<4x18xf32> to vector<4x16xf32>
    %c28_317 = arith.constant 28 : index
    %c240_318 = arith.constant 240 : index
    %359 = vector.load %arg6[%c28_317, %c240_318] : memref<36x256xf32, #tpu.memory_space<vmem>>, vector<4x16xf32>
    tpu.vector_store %arg6[%c28_317, %c240_318], %358 {strides = array<i32>} : memref<36x256xf32, #tpu.memory_space<vmem>>, vector<4x16xf32>,
    %360 = vector.extract_strided_slice %73 {offsets = [0, 2], sizes = [4, 16], strides = [1, 1]} : vector<4x18xf32> to vector<4x16xf32>
    %c32_319 = arith.constant 32 : index
    %c240_320 = arith.constant 240 : index
    %361 = vector.load %arg6[%c32_319, %c240_320] : memref<36x256xf32, #tpu.memory_space<vmem>>, vector<4x16xf32>
    tpu.vector_store %arg6[%c32_319, %c240_320], %360 {strides = array<i32>} : memref<36x256xf32, #tpu.memory_space<vmem>>, vector<4x16xf32>,
    %c0_321 = arith.constant 0 : index
    %c0_322 = arith.constant 0 : index
    %362 = vector.load %arg3[%c0_321, %c0_322] : memref<8x36xf32, #tpu.memory_space<vmem>>, vector<8x36xf32>
    %c0_323 = arith.constant 0 : index
    %c0_324 = arith.constant 0 : index
    %363 = vector.load %arg6[%c0_323, %c0_324] : memref<36x256xf32, #tpu.memory_space<vmem>>, vector<36x256xf32>
    %cst = arith.constant dense<0.000000e+00> : vector<8x256xf32>
    %364 = tpu.matmul %362, %363, %cst {dimension_numbers = #tpu.dot_dimension_numbers<[1], [0], [0], [1], [0, 0, 1, 1], [], []>} : vector<8x36xf32>, vector<36x256xf32>, vector<8x256xf32> -> vector<8x256xf32>
    %c0_325 = arith.constant 0 : index
    %c0_326 = arith.constant 0 : index
    %c0_327 = arith.constant 0 : index
    %365 = vector.load %arg4[%c0_325, %c0_326, %c0_327] : memref<1x8x256xf32, #tpu.memory_space<vmem>>, vector<1x8x256xf32>
    %366 = vector.shape_cast %365 : vector<1x8x256xf32> to vector<8x256xf32>
    %367 = vector.shape_cast %364 : vector<8x256xf32> to vector<1x8x256xf32>
    tpu.vector_store %arg4[%c0_325, %c0_326, %c0_327], %367 {strides = array<i32>} : memref<1x8x256xf32, #tpu.memory_space<vmem>>, vector<1x8x256xf32>,
    %cst_328 = arith.constant dense<0.000000e+00> : vector<8xf32>
    %368 = vector.multi_reduction <add>, %364, %cst_328 [1] : vector<8x256xf32> to vector<8xf32>
    %369 = vector.shape_cast %368 : vector<8xf32> to vector<8x1xf32>
    %c0_329 = arith.constant 0 : index
    %c0_330 = arith.constant 0 : index
    %c0_331 = arith.constant 0 : index
    %c0_332 = arith.constant 0 : index
    %370 = vector.load %arg5[%c0_329, %c0_330, %c0_331, %c0_332] : memref<1x1x8x2xf32, #tpu.memory_space<vmem>>, vector<1x1x8x1xf32>
    %371 = vector.shape_cast %370 : vector<1x1x8x1xf32> to vector<8x1xf32>
    %372 = vector.shape_cast %369 : vector<8x1xf32> to vector<1x1x8x1xf32>
    tpu.vector_store %arg5[%c0_329, %c0_330, %c0_331, %c0_332], %372 {strides = array<i32>} : memref<1x1x8x2xf32, #tpu.memory_space<vmem>>, vector<1x1x8x1xf32>,
    %373 = arith.mulf %364, %364 : vector<8x256xf32>
    %cst_333 = arith.constant dense<0.000000e+00> : vector<8xf32>
    %374 = vector.multi_reduction <add>, %373, %cst_333 [1] : vector<8x256xf32> to vector<8xf32>
    %375 = vector.shape_cast %374 : vector<8xf32> to vector<8x1xf32>
    %c0_334 = arith.constant 0 : index
    %c0_335 = arith.constant 0 : index
    %c0_336 = arith.constant 0 : index
    %c1 = arith.constant 1 : index
    %376 = vector.load %arg5[%c0_334, %c0_335, %c0_336, %c1] : memref<1x1x8x2xf32, #tpu.memory_space<vmem>>, vector<1x1x8x1xf32>
    %377 = vector.shape_cast %376 : vector<1x1x8x1xf32> to vector<8x1xf32>
    %378 = vector.shape_cast %375 : vector<8x1xf32> to vector<1x1x8x1xf32>
    tpu.vector_store %arg5[%c0_334, %c0_335, %c0_336, %c1], %378 {strides = array<i32>} : memref<1x1x8x2xf32, #tpu.memory_space<vmem>>, vector<1x1x8x1xf32>,
    return
  }
  func.func @transform_0(%arg0: i32, %arg1: i32) -> (i32, i32, i32, i32) {
    %c0_i32 = arith.constant 0 : i32
    %c0_i32_0 = arith.constant 0 : i32
    %c0_i32_1 = arith.constant 0 : i32
    %c0_i32_2 = arith.constant 0 : i32
    return %arg0, %c0_i32, %c0_i32_0, %c0_i32_1 : i32, i32, i32, i32
  }
  func.func @transform_1(%arg0: i32, %arg1: i32) -> (i32, i32) {
    %c0_i32 = arith.constant 0 : i32
    %c0_i32_0 = arith.constant 0 : i32
    %c0_i32_1 = arith.constant 0 : i32
    return %c0_i32, %c0_i32_0 : i32, i32
  }
  func.func @transform_2(%arg0: i32, %arg1: i32) -> (i32, i32, i32) {
    %c0_i32 = arith.constant 0 : i32
    %c0_i32_0 = arith.constant 0 : i32
    return %arg0, %c0_i32, %arg1 : i32, i32, i32
  }
  func.func @transform_3(%arg0: i32, %arg1: i32) -> (i32, i32, i32, i32) {
    %c0_i32 = arith.constant 0 : i32
    %c0_i32_0 = arith.constant 0 : i32
    %c0_i32_1 = arith.constant 0 : i32
    return %arg0, %arg1, %c0_i32, %c0_i32_0 : i32, i32, i32, i32
  }
}

</mosaic_0001>

<llo_original>
// kernel: convolution_forward.3
$region0: #{convolution_forward.3}
  #allocation0 [shape = 'u32[]', space=smem, size = 0x4, offset = 0x4, fixed_abs, tag = 'smem constant byte address 0x4 - core index']
  #allocation1 [shape = 'u32[144,128]{1,0:T(1,128)}', space=vmem, size = 0x12000, scoped, tag = 'internal scratch']
  %s0 = inlined_call_operand.vmem [shape: f32[2,8,256], index: 0, kind: input, shape index: {}]
  %s1 = inlined_call_operand.vmem [shape: f32[8,1], index: 1, kind: input, shape index: {}]
  %s2 = inlined_call_operand.vmem [shape: f32[8,1], index: 2, kind: input, shape index: {}]
  %s3 = inlined_call_operand.vmem [shape: f32[2,8,256], index: 3, kind: output, shape index: {}]
  %s4 = sld [smem:[#allocation0]]
  $region45: #{convolution_forward.3} parent=0
    _
  %s6 = ssub.s32 1, %s4
  %s7 = scalar_select 0, %s6, %s4
  loop: start=0, step=1, limit=4
  $region2: #{convolution_forward.3} parent=0 // loop_pre_header
    _
  $region3: #{convolution_forward.3} parent=0 // loop_header
    %s9 = sphi 0, %s13
    %p10 = scmp.ge.s32.totalorder %s9, 4
    %s16 = sphi 0, %s28
    %s17 = sphi 0, %s24
    %s18 = sphi 0, %s16
    %s19 = sphi 0, %s17
    %s20 = sphi 0, %s18
    %s21 = sphi 0, %s19
    %s33 = sphi 0, %s35
    %s36 = sphi 0, %s33
    %s37 = sphi 0, %s36
    %s53 = sphi 0, %s37
    %s57 = sphi 0, %s57
    %s59 = sphi 0, %s57
    %s60 = sphi 0, %s59
    %s74 = sphi 0, %s60
    %s78 = sphi 0, %s78
    %s80 = sphi 0, %s78
    %s81 = sphi 0, %s80
    %s95 = sphi 0, %s81
    %s103 = sphi 0, %s105
    %s106 = sphi 0, %s103
    %s107 = sphi 0, %s106
    %s123 = sphi 0, %s107
  $region4: #{convolution_forward.3} parent=0 // loop_header_branch
    %12 = sbr.rel (%p10) target = $region8
  $region5: #{convolution_forward.3} parent=0 // loop_body
    %s14 = ssub.s32 %s9, 1
    %s15 = ssub.s32 %s9, 2
    %s22 = sadd.s32 1, %s17
    %p23 = scmp.ge.s32.totalorder %s22, 1
    %s24 = scalar_select %p23, 0, %s22
    %s25 = sadd.s32 1, %s16
    %s26 = scalar_select %p23, %s25, %s16
    %p27 = scmp.ge.s32.totalorder %s26, 2
    %s28 = scalar_select %p27, 0, %s26
    %s29 = ssub.s32 %s16, %s28
    %s30 = ssub.s32 %s17, %s24
    %s31 = sor.u32 %s29, %s30
    %p32 = scmp.eq.s32.totalorder %s31, 0
    %s34 = sadd.s32 %s33, 1
    %s35 = scalar_select %p32, %s33, %s34
    %p38 = pneg %p32
    %p39 = scmp.eq.s32.totalorder %s9, 1
    %p40 = por %p38, %p39
    %p41 = scmp.ne.s32.totalorder %s33, %s36
    %p42 = scmp.eq.s32.totalorder %s9, 0
    %p43 = por %p41, %p42
    %p44 = scmp.ne.s32.totalorder %s33, %s36
    %p45 = scmp.eq.s32.totalorder %s14, 1
    %p46 = por %p44, %p45
    %p47 = scmp.ne.s32.totalorder %s36, %s37
    %p48 = scmp.eq.s32.totalorder %s14, 0
    %p49 = por %p47, %p48
    %p50 = scmp.ne.s32.totalorder %s36, %s37
    %p51 = scmp.eq.s32.totalorder %s15, 1
    %p52 = por %p50, %p51
    %p54 = scmp.ne.s32.totalorder %s37, %s53
    %p55 = scmp.eq.s32.totalorder %s15, 0
    %p56 = por %p54, %p55
    %s58 = sadd.s32 %s57, 1
    %p61 = scmp.eq.s32.totalorder %s9, 1
    %p62 = scmp.ne.s32.totalorder %s57, %s59
    %p63 = scmp.eq.s32.totalorder %s9, 0
    %p64 = por %p62, %p63
    %p65 = scmp.ne.s32.totalorder %s57, %s59
    %p66 = scmp.eq.s32.totalorder %s14, 1
    %p67 = por %p65, %p66
    %p68 = scmp.ne.s32.totalorder %s59, %s60
    %p69 = scmp.eq.s32.totalorder %s14, 0
    %p70 = por %p68, %p69
    %p71 = scmp.ne.s32.totalorder %s59, %s60
    %p72 = scmp.eq.s32.totalorder %s15, 1
    %p73 = por %p71, %p72
    %p75 = scmp.ne.s32.totalorder %s60, %s74
    %p76 = scmp.eq.s32.totalorder %s15, 0
    %p77 = por %p75, %p76
    %s79 = sadd.s32 %s78, 1
    %p82 = scmp.eq.s32.totalorder %s9, 1
    %p83 = scmp.ne.s32.totalorder %s78, %s80
    %p84 = scmp.eq.s32.totalorder %s9, 0
    %p85 = por %p83, %p84
    %p86 = scmp.ne.s32.totalorder %s78, %s80
    %p87 = scmp.eq.s32.totalorder %s14, 1
    %p88 = por %p86, %p87
    %p89 = scmp.ne.s32.totalorder %s80, %s81
    %p90 = scmp.eq.s32.totalorder %s14, 0
    %p91 = por %p89, %p90
    %p92 = scmp.ne.s32.totalorder %s80, %s81
    %p93 = scmp.eq.s32.totalorder %s15, 1
    %p94 = por %p92, %p93
    %p96 = scmp.ne.s32.totalorder %s81, %s95
    %p97 = scmp.eq.s32.totalorder %s15, 0
    %p98 = por %p96, %p97
    %s99 = ssub.s32 %s16, %s28
    %s100 = ssub.s32 %s17, %s24
    %s101 = sor.u32 %s99, %s100
    %p102 = scmp.eq.s32.totalorder %s101, 0
    %s104 = sadd.s32 %s103, 1
    %s105 = scalar_select %p102, %s103, %s104
    %p108 = pneg %p102
    %p109 = scmp.eq.s32.totalorder %s9, 1
    %p110 = por %p108, %p109
    %p111 = scmp.ne.s32.totalorder %s103, %s106
    %p112 = scmp.eq.s32.totalorder %s9, 0
    %p113 = por %p111, %p112
    %p114 = scmp.ne.s32.totalorder %s103, %s106
    %p115 = scmp.eq.s32.totalorder %s14, 1
    %p116 = por %p114, %p115
    %p117 = scmp.ne.s32.totalorder %s106, %s107
    %p118 = scmp.eq.s32.totalorder %s14, 0
    %p119 = por %p117, %p118
    %p120 = scmp.ne.s32.totalorder %s106, %s107
    %p121 = scmp.eq.s32.totalorder %s15, 1
    %p122 = por %p120, %p121
    %p124 = scmp.ne.s32.totalorder %s107, %s123
    %p125 = scmp.eq.s32.totalorder %s15, 0
    %p126 = por %p124, %p125
    %p127 = scmp.le.s32.totalorder 1, %s9
    %p128 = scmp.lt.s32.totalorder %s9, 3
    %p129 = pnand %p127, %p128
    %p130 = pneg %p129
    // Predicated region
    $region9: #{convolution_forward.3} parent=5 // pred_check
      _
    $region10: #{convolution_forward.3} parent=5 // pred_check_branch
      %132 = sbr.rel (%p129) target = $region12
    $region11: #{convolution_forward.3} parent=5 // pred_region
      %s133 = ssub.s32 %s9, 1
      // Predicated region
      $region13: #{convolution_forward.3} parent=11 // pred_check
        %p134 = pneg %p70
      $region14: #{convolution_forward.3} parent=11 // pred_check_branch
        %136 = sbr.rel (%p134) target = $region16
      $region15: #{convolution_forward.3} parent=11 // pred_region
        _
      $region16: #{convolution_forward.3} parent=11 // pred_fallthru
        _
      // Predicated region
      $region17: #{convolution_forward.3} parent=11 // pred_check
        %p137 = pneg %p91
      $region18: #{convolution_forward.3} parent=11 // pred_check_branch
        %139 = sbr.rel (%p137) target = $region20
      $region19: #{convolution_forward.3} parent=11 // pred_region
        _
      $region20: #{convolution_forward.3} parent=11 // pred_fallthru
        _
    $region12: #{convolution_forward.3} parent=5 // pred_fallthru
      _
    %p140 = scmp.lt.s32.totalorder %s9, 2
    // Predicated region
    $region21: #{convolution_forward.3} parent=5 // pred_check
      %p141 = pneg %p140
    $region22: #{convolution_forward.3} parent=5 // pred_check_branch
      %143 = sbr.rel (%p141) target = $region24
    $region23: #{convolution_forward.3} parent=5 // pred_region
      // Predicated region
      $region25: #{convolution_forward.3} parent=23 // pred_check
        %p144 = pneg %p43
      $region26: #{convolution_forward.3} parent=23 // pred_check_branch
        %146 = sbr.rel (%p144) target = $region28
      $region27: #{convolution_forward.3} parent=23 // pred_region
        %s147 = smul.u32 2, %s17
        %p148 = scmp.lt.s32.totalorder %s16, 1
        %s149 = scalar_select %p148, %s16, 1
        %p150 = scmp.lt.s32.totalorder %s147, 1
        %s151 = scalar_select %p150, %s147, 1
        %s152 = smul.addr %s149, 2
        %s153 = sadd.s32 %s151, %s152
        %s154 = smul.addr %s153, 8
        %s155 = scalar_lea.vmem %s0, %s154
        %s156 = smul.u32 2, %s17
      $region28: #{convolution_forward.3} parent=23 // pred_fallthru
        _
    $region24: #{convolution_forward.3} parent=5 // pred_fallthru
      _
    %p157 = scmp.le.s32.totalorder 1, %s9
    %p158 = scmp.lt.s32.totalorder %s9, 3
    %p159 = pnand %p157, %p158
    %p160 = pneg %p159
    // Predicated region
    $region29: #{convolution_forward.3} parent=5 // pred_check
      _
    $region30: #{convolution_forward.3} parent=5 // pred_check_branch
      %162 = sbr.rel (%p159) target = $region32
    $region31: #{convolution_forward.3} parent=5 // pred_region
      %s163 = ssub.s32 %s9, 1
      %s164 = smul.u32 2, %s19
      %p165 = scmp.lt.s32.totalorder %s18, 1
      %s166 = scalar_select %p165, %s18, 1
      %p167 = scmp.lt.s32.totalorder %s164, 1
      %s168 = scalar_select %p167, %s164, 1
      %s169 = smul.addr %s166, 2
      %s170 = sadd.s32 %s168, %s169
      %s171 = smul.addr %s170, 8
      %s172 = scalar_lea.vmem %s0, %s171
      %p173 = pneg %p49
      %p174 = pneg %p46
      %p175 = pneg %p70
      %p176 = pneg %p67
      %p177 = pneg %p91
      %p178 = pneg %p88
      %p179 = pneg %p119
      %p180 = pneg %p116
      %s181 = smul.u32 2, %s19
      %p182 = scmp.lt.s32.totalorder %s18, 1
      %s183 = scalar_select %p182, %s18, 1
      %p184 = scmp.lt.s32.totalorder %s181, 1
      %s185 = scalar_select %p184, %s181, 1
      %s186 = smul.addr %s183, 2
      %s187 = sadd.s32 %s185, %s186
      %s188 = smul.addr %s187, 8
      %s189 = scalar_lea.vmem %s3, %s188
      %s190 = smul.u32 2, %s19
      %p191 = scmp.lt.s32.totalorder %s18, 1
      %s192 = scalar_select %p191, %s18, 1
      %p193 = scmp.lt.s32.totalorder %s190, 1
      %s194 = scalar_select %p193, %s190, 1
      %s195 = smul.addr %s192, 2
      %s196 = sadd.s32 %s194, %s195
      %s197 = smul.addr %s196, 8
      %s198 = scalar_lea.vmem %s0, %s197
      %s199 = smul.u32 2, %s19
      %s200 = smul.u32 2, %s19
      %p201 = scmp.lt.s32.totalorder %s18, 1
      %s202 = scalar_select %p201, %s18, 1
      %p203 = scmp.lt.s32.totalorder %s200, 1
      %s204 = scalar_select %p203, %s200, 1
      %s205 = smul.addr %s202, 2
      %s206 = sadd.s32 %s204, %s205
      %s207 = smul.addr %s206, 8
      %s208 = scalar_lea.vmem %s3, %s207
      %s209 = smul.u32 2, %s19
      %v210 = vld [vmem:[%s198] sm:$0xff]
      %v211 = vld [vmem:[%s198 + $0x8] sm:$0xff]
      %v212 = vld [vmem:[%s1] sm:$0xff]
      %214 = vset.pattern.permute.xlu0 0
      %215 = vperm.xlu0 %214, %v212
      %v216 = vpop.permute.xlu0 %215
      %v218 = vmul.f32 %v210, %v216
      %v219 = vmul.f32 %v211, %v216
      %v220 = vld [vmem:[%s2] sm:$0xff]
      %222 = vset.pattern.permute.xlu0 0
      %223 = vperm.xlu0 %222, %v220
      %v224 = vpop.permute.xlu0 %223
      %v226 = vadd.f32 %v218, %v224
      %v227 = vadd.f32 %v219, %v224
      %v228 = vmax.f32 %v226, 0.0
      %v229 = vmax.f32 %v227, 0.0
      %230 = vst [vmem:[%s208] sm:$0xff] %v228
      %231 = vst [vmem:[%s208 + $0x8] sm:$0xff] %v229
      %s232 = smul.u32 2, %s19
      %p233 = scmp.lt.s32.totalorder %s18, 1
      %s234 = scalar_select %p233, %s18, 1
      %p235 = scmp.lt.s32.totalorder %s232, 1
      %s236 = scalar_select %p235, %s232, 1
      %s237 = smul.addr %s234, 2
      %s238 = sadd.s32 %s236, %s237
      %s239 = smul.addr %s238, 8
      %s240 = scalar_lea.vmem %s3, %s239
      // Predicated region
      $region33: #{convolution_forward.3} parent=31 // pred_check
        %p241 = pneg %p116
      $region34: #{convolution_forward.3} parent=31 // pred_check_branch
        %243 = sbr.rel (%p241) target = $region36
      $region35: #{convolution_forward.3} parent=31 // pred_region
        %s244 = smul.u32 2, %s19
      $region36: #{convolution_forward.3} parent=31 // pred_fallthru
        _
    $region32: #{convolution_forward.3} parent=5 // pred_fallthru
      _
    %p245 = scmp.le.s32.totalorder 2, %s9
    // Predicated region
    $region37: #{convolution_forward.3} parent=5 // pred_check
      %p246 = pneg %p245
    $region38: #{convolution_forward.3} parent=5 // pred_check_branch
      %248 = sbr.rel (%p246) target = $region40
    $region39: #{convolution_forward.3} parent=5 // pred_region
      %s249 = ssub.s32 %s9, 2
      // Predicated region
      $region41: #{convolution_forward.3} parent=39 // pred_check
        %p250 = pneg %p122
      $region42: #{convolution_forward.3} parent=39 // pred_check_branch
        %252 = sbr.rel (%p250) target = $region44
      $region43: #{convolution_forward.3} parent=39 // pred_region
        %s253 = smul.u32 2, %s21
        %p254 = scmp.lt.s32.totalorder %s20, 1
        %s255 = scalar_select %p254, %s20, 1
        %p256 = scmp.lt.s32.totalorder %s253, 1
        %s257 = scalar_select %p256, %s253, 1
        %s258 = smul.addr %s255, 2
        %s259 = sadd.s32 %s257, %s258
        %s260 = smul.addr %s259, 8
        %s261 = scalar_lea.vmem %s3, %s260
      $region44: #{convolution_forward.3} parent=39 // pred_fallthru
        _
    $region40: #{convolution_forward.3} parent=5 // pred_fallthru
      _
  $region6: #{convolution_forward.3} parent=0 // loop_footer
    %s13 = sadd.s32 1, %s9
  $region7: #{convolution_forward.3} parent=0 // loop_footer_branch
    %8 = sbr.rel target = $region3
  $region8: #{convolution_forward.3} parent=0 // loop_exit
    _

// kernel: convolution_forward.2
$region0: #{convolution_forward.2}
  #allocation0 [shape = 'u32[]', space=smem, size = 0x4, offset = 0x4, fixed_abs, tag = 'smem constant byte address 0x4 - core index']
  #allocation1 [shape = 'u32[144,128]{1,0:T(1,128)}', space=vmem, size = 0x12000, scoped, tag = 'internal scratch']
  #allocation2 [shape = 'f32[36,256]{1,0:T(8,128)}', space=vmem, size = 0xa000, scoped, tag = 'scratch operand']
  %s0 = inlined_call_operand.vmem [shape: f32[2,18,4,18], index: 0, kind: input, shape index: {}]
  %s1 = inlined_call_operand.vmem [shape: f32[8,36], index: 1, kind: input, shape index: {}]
  %s2 = inlined_call_operand.vmem [shape: f32[2,8,256], index: 2, kind: output, shape index: {0}]
  %s3 = inlined_call_operand.vmem [shape: f32[2,1,8,2], index: 3, kind: output, shape index: {1}]
  %4 = xla_tuple %s2, %s3
  %s5 = sld [smem:[#allocation0]]
  $region49: #{convolution_forward.2} parent=0
    _
  %s7 = ssub.s32 1, %s5
  %s8 = scalar_select 0, %s7, %s5
  loop: start=0, step=1, limit=4
  $region2: #{convolution_forward.2} parent=0 // loop_pre_header
    _
  $region3: #{convolution_forward.2} parent=0 // loop_header
    %s10 = sphi 0, %s14
    %p11 = scmp.ge.s32.totalorder %s10, 4
    %s17 = sphi 0, %s29
    %s18 = sphi 0, %s25
    %s19 = sphi 0, %s17
    %s20 = sphi 0, %s18
    %s21 = sphi 0, %s19
    %s22 = sphi 0, %s20
    %s32 = sphi 0, %s34
    %s35 = sphi 0, %s32
    %s36 = sphi 0, %s35
    %s52 = sphi 0, %s36
    %s56 = sphi 0, %s56
    %s58 = sphi 0, %s56
    %s59 = sphi 0, %s58
    %s73 = sphi 0, %s59
    %s81 = sphi 0, %s83
    %s84 = sphi 0, %s81
    %s85 = sphi 0, %s84
    %s101 = sphi 0, %s85
    %s109 = sphi 0, %s111
    %s112 = sphi 0, %s109
    %s113 = sphi 0, %s112
    %s129 = sphi 0, %s113
  $region4: #{convolution_forward.2} parent=0 // loop_header_branch
    %13 = sbr.rel (%p11) target = $region8
  $region5: #{convolution_forward.2} parent=0 // loop_body
    %s15 = ssub.s32 %s10, 1
    %s16 = ssub.s32 %s10, 2
    %s23 = sadd.s32 1, %s18
    %p24 = scmp.ge.s32.totalorder %s23, 1
    %s25 = scalar_select %p24, 0, %s23
    %s26 = sadd.s32 1, %s17
    %s27 = scalar_select %p24, %s26, %s17
    %p28 = scmp.ge.s32.totalorder %s27, 2
    %s29 = scalar_select %p28, 0, %s27
    %s30 = ssub.s32 %s17, %s29
    %p31 = scmp.eq.s32.totalorder %s30, 0
    %s33 = sadd.s32 %s32, 1
    %s34 = scalar_select %p31, %s32, %s33
    %p37 = pneg %p31
    %p38 = scmp.eq.s32.totalorder %s10, 1
    %p39 = por %p37, %p38
    %p40 = scmp.ne.s32.totalorder %s32, %s35
    %p41 = scmp.eq.s32.totalorder %s10, 0
    %p42 = por %p40, %p41
    %p43 = scmp.ne.s32.totalorder %s32, %s35
    %p44 = scmp.eq.s32.totalorder %s15, 1
    %p45 = por %p43, %p44
    %p46 = scmp.ne.s32.totalorder %s35, %s36
    %p47 = scmp.eq.s32.totalorder %s15, 0
    %p48 = por %p46, %p47
    %p49 = scmp.ne.s32.totalorder %s35, %s36
    %p50 = scmp.eq.s32.totalorder %s16, 1
    %p51 = por %p49, %p50
    %p53 = scmp.ne.s32.totalorder %s36, %s52
    %p54 = scmp.eq.s32.totalorder %s16, 0
    %p55 = por %p53, %p54
    %s57 = sadd.s32 %s56, 1
    %p60 = scmp.eq.s32.totalorder %s10, 1
    %p61 = scmp.ne.s32.totalorder %s56, %s58
    %p62 = scmp.eq.s32.totalorder %s10, 0
    %p63 = por %p61, %p62
    %p64 = scmp.ne.s32.totalorder %s56, %s58
    %p65 = scmp.eq.s32.totalorder %s15, 1
    %p66 = por %p64, %p65
    %p67 = scmp.ne.s32.totalorder %s58, %s59
    %p68 = scmp.eq.s32.totalorder %s15, 0
    %p69 = por %p67, %p68
    %p70 = scmp.ne.s32.totalorder %s58, %s59
    %p71 = scmp.eq.s32.totalorder %s16, 1
    %p72 = por %p70, %p71
    %p74 = scmp.ne.s32.totalorder %s59, %s73
    %p75 = scmp.eq.s32.totalorder %s16, 0
    %p76 = por %p74, %p75
    %s77 = ssub.s32 %s17, %s29
    %s78 = ssub.s32 %s18, %s25
    %s79 = sor.u32 %s77, %s78
    %p80 = scmp.eq.s32.totalorder %s79, 0
    %s82 = sadd.s32 %s81, 1
    %s83 = scalar_select %p80, %s81, %s82
    %p86 = pneg %p80
    %p87 = scmp.eq.s32.totalorder %s10, 1
    %p88 = por %p86, %p87
    %p89 = scmp.ne.s32.totalorder %s81, %s84
    %p90 = scmp.eq.s32.totalorder %s10, 0
    %p91 = por %p89, %p90
    %p92 = scmp.ne.s32.totalorder %s81, %s84
    %p93 = scmp.eq.s32.totalorder %s15, 1
    %p94 = por %p92, %p93
    %p95 = scmp.ne.s32.totalorder %s84, %s85
    %p96 = scmp.eq.s32.totalorder %s15, 0
    %p97 = por %p95, %p96
    %p98 = scmp.ne.s32.totalorder %s84, %s85
    %p99 = scmp.eq.s32.totalorder %s16, 1
    %p100 = por %p98, %p99
    %p102 = scmp.ne.s32.totalorder %s85, %s101
    %p103 = scmp.eq.s32.totalorder %s16, 0
    %p104 = por %p102, %p103
    %s105 = ssub.s32 %s17, %s29
    %s106 = ssub.s32 %s18, %s25
    %s107 = sor.u32 %s105, %s106
    %p108 = scmp.eq.s32.totalorder %s107, 0
    %s110 = sadd.s32 %s109, 1
    %s111 = scalar_select %p108, %s109, %s110
    %p114 = pneg %p108
    %p115 = scmp.eq.s32.totalorder %s10, 1
    %p116 = por %p114, %p115
    %p117 = scmp.ne.s32.totalorder %s109, %s112
    %p118 = scmp.eq.s32.totalorder %s10, 0
    %p119 = por %p117, %p118
    %p120 = scmp.ne.s32.totalorder %s109, %s112
    %p121 = scmp.eq.s32.totalorder %s15, 1
    %p122 = por %p120, %p121
    %p123 = scmp.ne.s32.totalorder %s112, %s113
    %p124 = scmp.eq.s32.totalorder %s15, 0
    %p125 = por %p123, %p124
    %p126 = scmp.ne.s32.totalorder %s112, %s113
    %p127 = scmp.eq.s32.totalorder %s16, 1
    %p128 = por %p126, %p127
    %p130 = scmp.ne.s32.totalorder %s113, %s129
    %p131 = scmp.eq.s32.totalorder %s16, 0
    %p132 = por %p130, %p131
    %p133 = scmp.le.s32.totalorder 1, %s10
    %p134 = scmp.lt.s32.totalorder %s10, 3
    %p135 = pnand %p133, %p134
    %p136 = pneg %p135
    // Predicated region
    $region9: #{convolution_forward.2} parent=5 // pred_check
      _
    $region10: #{convolution_forward.2} parent=5 // pred_check_branch
      %138 = sbr.rel (%p135) target = $region12
    $region11: #{convolution_forward.2} parent=5 // pred_region
      %s139 = ssub.s32 %s10, 1
      // Predicated region
      $region13: #{convolution_forward.2} parent=11 // pred_check
        %p140 = pneg %p69
      $region14: #{convolution_forward.2} parent=11 // pred_check_branch
        %142 = sbr.rel (%p140) target = $region16
      $region15: #{convolution_forward.2} parent=11 // pred_region
        _
      $region16: #{convolution_forward.2} parent=11 // pred_fallthru
        _
    $region12: #{convolution_forward.2} parent=5 // pred_fallthru
      _
    %p143 = scmp.lt.s32.totalorder %s10, 2
    // Predicated region
    $region17: #{convolution_forward.2} parent=5 // pred_check
      %p144 = pneg %p143
    $region18: #{convolution_forward.2} parent=5 // pred_check_branch
      %146 = sbr.rel (%p144) target = $region20
    $region19: #{convolution_forward.2} parent=5 // pred_region
      // Predicated region
      $region21: #{convolution_forward.2} parent=19 // pred_check
        %p147 = pneg %p42
      $region22: #{convolution_forward.2} parent=19 // pred_check_branch
        %149 = sbr.rel (%p147) target = $region24
      $region23: #{convolution_forward.2} parent=19 // pred_region
        %p150 = scmp.lt.s32.totalorder %s17, 1
        %s151 = scalar_select %p150, %s17, 1
        %s152 = smul.addr %s151, 18
        %s153 = smul.addr %s152, 4
        %s154 = scalar_lea.vmem %s0, %s153
      $region24: #{convolution_forward.2} parent=19 // pred_fallthru
        _
    $region20: #{convolution_forward.2} parent=5 // pred_fallthru
      _
    %p155 = scmp.le.s32.totalorder 1, %s10
    %p156 = scmp.lt.s32.totalorder %s10, 3
    %p157 = pnand %p155, %p156
    %p158 = pneg %p157
    // Predicated region
    $region25: #{convolution_forward.2} parent=5 // pred_check
      _
    $region26: #{convolution_forward.2} parent=5 // pred_check_branch
      %160 = sbr.rel (%p157) target = $region28
    $region27: #{convolution_forward.2} parent=5 // pred_region
      %s161 = ssub.s32 %s10, 1
      %p162 = scmp.lt.s32.totalorder %s19, 1
      %s163 = scalar_select %p162, %s19, 1
      %s164 = smul.addr %s163, 18
      %s165 = smul.addr %s164, 4
      %s166 = scalar_lea.vmem %s0, %s165
      %p167 = pneg %p48
      %p168 = pneg %p45
      %p169 = pneg %p69
      %p170 = pneg %p66
      %p171 = pneg %p97
      %p172 = pneg %p94
      %s173 = smul.u32 2, %s20
      %p174 = scmp.lt.s32.totalorder %s19, 1
      %s175 = scalar_select %p174, %s19, 1
      %p176 = scmp.lt.s32.totalorder %s173, 1
      %s177 = scalar_select %p176, %s173, 1
      %s178 = smul.addr %s175, 2
      %s179 = sadd.s32 %s177, %s178
      %s180 = smul.addr %s179, 8
      %s181 = scalar_lea.vmem %s2, %s180
      %p182 = pneg %p125
      %p183 = pneg %p122
      %p184 = scmp.lt.s32.totalorder %s19, 1
      %s185 = scalar_select %p184, %s19, 1
      %p186 = scmp.lt.s32.totalorder %s20, 0
      %s187 = scalar_select %p186, %s20, 0
      %s188 = sadd.s32 %s187, %s185
      %s189 = smul.addr %s188, 8
      %s190 = scalar_lea.vmem %s3, %s189
      %p191 = scmp.lt.s32.totalorder %s19, 1
      %s192 = scalar_select %p191, %s19, 1
      %s193 = smul.addr %s192, 18
      %s194 = smul.addr %s193, 4
      %s195 = scalar_lea.vmem %s0, %s194
      %s196 = smul.u32 2, %s20
      %p197 = scmp.lt.s32.totalorder %s19, 1
      %s198 = scalar_select %p197, %s19, 1
      %p199 = scmp.lt.s32.totalorder %s196, 1
      %s200 = scalar_select %p199, %s196, 1
      %s201 = smul.addr %s198, 2
      %s202 = sadd.s32 %s200, %s201
      %s203 = smul.addr %s202, 8
      %s204 = scalar_lea.vmem %s2, %s203
      %s205 = smul.u32 2, %s20
      %p206 = scmp.lt.s32.totalorder %s19, 1
      %s207 = scalar_select %p206, %s19, 1
      %p208 = scmp.lt.s32.totalorder %s20, 0
      %s209 = scalar_select %p208, %s20, 0
      %s210 = sadd.s32 %s209, %s207
      %s211 = smul.addr %s210, 8
      %s212 = scalar_lea.vmem %s3, %s211
      %s213 = smul.u32 %s20, 16
      %s214 = smul.u32 %s213, 4
      %s215 = scalar_lea.vmem %s195, %s214
      %v216 = vld [vmem:[%s215] sm:$0xf]
      %s217 = sadd.s32 %s213, 1
      %s218 = smul.u32 %s217, 4
      %s219 = scalar_lea.vmem %s195, %s218
      %v220 = vld [vmem:[%s219] sm:$0xf]
      %s221 = sadd.s32 %s213, 2
      %s222 = smul.u32 %s221, 4
      %s223 = scalar_lea.vmem %s195, %s222
      %v224 = vld [vmem:[%s223] sm:$0xf]
      %s225 = sadd.s32 %s213, 3
      %s226 = smul.u32 %s225, 4
      %s227 = scalar_lea.vmem %s195, %s226
      %v228 = vld [vmem:[%s227] sm:$0xf]
      %s229 = sadd.s32 %s213, 4
      %s230 = smul.u32 %s229, 4
      %s231 = scalar_lea.vmem %s195, %s230
      %v232 = vld [vmem:[%s231] sm:$0xf]
      %s233 = sadd.s32 %s213, 5
      %s234 = smul.u32 %s233, 4
      %s235 = scalar_lea.vmem %s195, %s234
      %v236 = vld [vmem:[%s235] sm:$0xf]
      %s237 = sadd.s32 %s213, 6
      %s238 = smul.u32 %s237, 4
      %s239 = scalar_lea.vmem %s195, %s238
      %v240 = vld [vmem:[%s239] sm:$0xf]
      %s241 = sadd.s32 %s213, 7
      %s242 = smul.u32 %s241, 4
      %s243 = scalar_lea.vmem %s195, %s242
      %v244 = vld [vmem:[%s243] sm:$0xf]
      %s245 = sadd.s32 %s213, 8
      %s246 = smul.u32 %s245, 4
      %s247 = scalar_lea.vmem %s195, %s246
      %v248 = vld [vmem:[%s247] sm:$0xf]
      %s249 = sadd.s32 %s213, 9
      %s250 = smul.u32 %s249, 4
      %s251 = scalar_lea.vmem %s195, %s250
      %v252 = vld [vmem:[%s251] sm:$0xf]
      %s253 = sadd.s32 %s213, 10
      %s254 = smul.u32 %s253, 4
      %s255 = scalar_lea.vmem %s195, %s254
      %v256 = vld [vmem:[%s255] sm:$0xf]
      %s257 = sadd.s32 %s213, 11
      %s258 = smul.u32 %s257, 4
      %s259 = scalar_lea.vmem %s195, %s258
      %v260 = vld [vmem:[%s259] sm:$0xf]
      %s261 = sadd.s32 %s213, 12
      %s262 = smul.u32 %s261, 4
      %s263 = scalar_lea.vmem %s195, %s262
      %v264 = vld [vmem:[%s263] sm:$0xf]
      %s265 = sadd.s32 %s213, 13
      %s266 = smul.u32 %s265, 4
      %s267 = scalar_lea.vmem %s195, %s266
      %v268 = vld [vmem:[%s267] sm:$0xf]
      %s269 = sadd.s32 %s213, 14
      %s270 = smul.u32 %s269, 4
      %s271 = scalar_lea.vmem %s195, %s270
      %v272 = vld [vmem:[%s271] sm:$0xf]
      %s273 = sadd.s32 %s213, 15
      %s274 = smul.u32 %s273, 4
      %s275 = scalar_lea.vmem %s195, %s274
      %v276 = vld [vmem:[%s275] sm:$0xf]
      %s277 = sadd.s32 %s213, 16
      %s278 = smul.u32 %s277, 4
      %s279 = scalar_lea.vmem %s195, %s278
      %v280 = vld [vmem:[%s279] sm:$0xf]
      %s281 = sadd.s32 %s213, 17
      %s282 = smul.u32 %s281, 4
      %s283 = scalar_lea.vmem %s195, %s282
      %v284 = vld [vmem:[%s283] sm:$0xf]
      %vm285 = vcmask 125952
      %286 = vst.msk [vmem:[#allocation2] sm:$0xf] %vm285, %v216
      %v288 = vrot.slane %v216, 4
      %289 = vrot.lane.b32.xlu0 %v288, 127
      %v290 = vpop.permute.xlu0 %289
      %vm292 = vcmask 130052
      %293 = vst.msk [vmem:[#allocation2] sm:$0xf0] %vm292, %v290
      %294 = vrot.lane.b32.xlu0 %v216, 126
      %v295 = vpop.permute.xlu0 %294
      %297 = vst.msk [vmem:[#allocation2 + $0x10] sm:$0xf] %vm285, %v295
      %v299 = vrot.slane %v220, 4
      %301 = vst.msk [vmem:[#allocation2 + $0x10] sm:$0xf0] %vm292, %v299
      %302 = vrot.lane.b32.xlu0 %v220, 127
      %v303 = vpop.permute.xlu0 %302
      %305 = vst.msk [vmem:[#allocation2 + $0x20] sm:$0xf] %vm285, %v303
      %306 = vrot.lane.b32.xlu0 %v299, 126
      %v307 = vpop.permute.xlu0 %306
      %309 = vst.msk [vmem:[#allocation2 + $0x20] sm:$0xf0] %vm292, %v307
      %310 = vst.msk [vmem:[#allocation2 + $0x30] sm:$0xf] %vm285, %v224
      %v312 = vrot.slane %v224, 4
      %313 = vrot.lane.b32.xlu0 %v312, 127
      %v314 = vpop.permute.xlu0 %313
      %316 = vst.msk [vmem:[#allocation2 + $0x30] sm:$0xf0] %vm292, %v314
      %317 = vrot.lane.b32.xlu0 %v224, 126
      %v318 = vpop.permute.xlu0 %317
      %320 = vst.msk [vmem:[#allocation2 + $0x40] sm:$0xf] %vm285, %v318
      %321 = vrot.lane.b32.xlu0 %v220, 16
      %v322 = vpop.permute.xlu0 %321
      %vm324 = vcmask 257152
      %325 = vst.msk [vmem:[#allocation2] sm:$0xf] %vm324, %v322
      %326 = vrot.lane.b32.xlu0 %v299, 15
      %v327 = vpop.permute.xlu0 %326
      %vm329 = vcmask 261252
      %330 = vst.msk [vmem:[#allocation2] sm:$0xf0] %vm329, %v327
      %331 = vrot.lane.b32.xlu0 %v220, 14
      %v332 = vpop.permute.xlu0 %331
      %334 = vst.msk [vmem:[#allocation2 + $0x10] sm:$0xf] %vm324, %v332
      %335 = vrot.lane.b32.xlu0 %v312, 16
      %v336 = vpop.permute.xlu0 %335
      %338 = vst.msk [vmem:[#allocation2 + $0x10] sm:$0xf0] %vm329, %v336
      %339 = vrot.lane.b32.xlu0 %v224, 15
      %v340 = vpop.permute.xlu0 %339
      %342 = vst.msk [vmem:[#allocation2 + $0x20] sm:$0xf] %vm324, %v340
      %343 = vrot.lane.b32.xlu0 %v312, 14
      %v344 = vpop.permute.xlu0 %343
      %346 = vst.msk [vmem:[#allocation2 + $0x20] sm:$0xf0] %vm329, %v344
      %348 = vrot.lane.b32.xlu0 %v228, 16
      %v349 = vpop.permute.xlu0 %348
      %351 = vst.msk [vmem:[#allocation2 + $0x30] sm:$0xf] %vm324, %v349
      %v352 = vrot.slane %v228, 4
      %353 = vrot.lane.b32.xlu0 %v352, 15
      %v354 = vpop.permute.xlu0 %353
      %356 = vst.msk [vmem:[#allocation2 + $0x30] sm:$0xf0] %vm329, %v354
      %357 = vrot.lane.b32.xlu0 %v228, 14
      %v358 = vpop.permute.xlu0 %357
      %360 = vst.msk [vmem:[#allocation2 + $0x40] sm:$0xf] %vm324, %v358
      %361 = vrot.lane.b32.xlu0 %v224, 32
      %v362 = vpop.permute.xlu0 %361
      %vm364 = vcmask 388352
      %365 = vst.msk [vmem:[#allocation2] sm:$0xf] %vm364, %v362
      %366 = vrot.lane.b32.xlu0 %v312, 31
      %v367 = vpop.permute.xlu0 %366
      %vm369 = vcmask 392452
      %370 = vst.msk [vmem:[#allocation2] sm:$0xf0] %vm369, %v367
      %371 = vrot.lane.b32.xlu0 %v224, 30
      %v372 = vpop.permute.xlu0 %371
      %374 = vst.msk [vmem:[#allocation2 + $0x10] sm:$0xf] %vm364, %v372
      %375 = vrot.lane.b32.xlu0 %v352, 32
      %v376 = vpop.permute.xlu0 %375
      %378 = vst.msk [vmem:[#allocation2 + $0x10] sm:$0xf0] %vm369, %v376
      %379 = vrot.lane.b32.xlu0 %v228, 31
      %v380 = vpop.permute.xlu0 %379
      %382 = vst.msk [vmem:[#allocation2 + $0x20] sm:$0xf] %vm364, %v380
      %383 = vrot.lane.b32.xlu0 %v352, 30
      %v384 = vpop.permute.xlu0 %383
      %386 = vst.msk [vmem:[#allocation2 + $0x20] sm:$0xf0] %vm369, %v384
      %388 = vrot.lane.b32.xlu0 %v232, 32
      %v389 = vpop.permute.xlu0 %388
      %391 = vst.msk [vmem:[#allocation2 + $0x30] sm:$0xf] %vm364, %v389
      %v392 = vrot.slane %v232, 4
      %393 = vrot.lane.b32.xlu0 %v392, 31
      %v394 = vpop.permute.xlu0 %393
      %396 = vst.msk [vmem:[#allocation2 + $0x30] sm:$0xf0] %vm369, %v394
      %397 = vrot.lane.b32.xlu0 %v232, 30
      %v398 = vpop.permute.xlu0 %397
      %400 = vst.msk [vmem:[#allocation2 + $0x40] sm:$0xf] %vm364, %v398
      %401 = vrot.lane.b32.xlu0 %v228, 48
      %v402 = vpop.permute.xlu0 %401
      %vm404 = vcmask 519552
      %405 = vst.msk [vmem:[#allocation2] sm:$0xf] %vm404, %v402
      %406 = vrot.lane.b32.xlu0 %v352, 47
      %v407 = vpop.permute.xlu0 %406
      %vm409 = vcmask 523652
      %410 = vst.msk [vmem:[#allocation2] sm:$0xf0] %vm409, %v407
      %411 = vrot.lane.b32.xlu0 %v228, 46
      %v412 = vpop.permute.xlu0 %411
      %414 = vst.msk [vmem:[#allocation2 + $0x10] sm:$0xf] %vm404, %v412
      %415 = vrot.lane.b32.xlu0 %v392, 48
      %v416 = vpop.permute.xlu0 %415
      %418 = vst.msk [vmem:[#allocation2 + $0x10] sm:$0xf0] %vm409, %v416
      %419 = vrot.lane.b32.xlu0 %v232, 47
      %v420 = vpop.permute.xlu0 %419
      %422 = vst.msk [vmem:[#allocation2 + $0x20] sm:$0xf] %vm404, %v420
      %423 = vrot.lane.b32.xlu0 %v392, 46
      %v424 = vpop.permute.xlu0 %423
      %426 = vst.msk [vmem:[#allocation2 + $0x20] sm:$0xf0] %vm409, %v424
      %428 = vrot.lane.b32.xlu0 %v236, 48
      %v429 = vpop.permute.xlu0 %428
      %431 = vst.msk [vmem:[#allocation2 + $0x30] sm:$0xf] %vm404, %v429
      %v432 = vrot.slane %v236, 4
      %433 = vrot.lane.b32.xlu0 %v432, 47
      %v434 = vpop.permute.xlu0 %433
      %436 = vst.msk [vmem:[#allocation2 + $0x30] sm:$0xf0] %vm409, %v434
      %437 = vrot.lane.b32.xlu0 %v236, 46
      %v438 = vpop.permute.xlu0 %437
      %440 = vst.msk [vmem:[#allocation2 + $0x40] sm:$0xf] %vm404, %v438
      %441 = vrot.lane.b32.xlu0 %v232, 64
      %v442 = vpop.permute.xlu0 %441
      %vm444 = vcmask 650752
      %445 = vst.msk [vmem:[#allocation2] sm:$0xf] %vm444, %v442
      %446 = vrot.lane.b32.xlu0 %v392, 63
      %v447 = vpop.permute.xlu0 %446
      %vm449 = vcmask 654852
      %450 = vst.msk [vmem:[#allocation2] sm:$0xf0] %vm449, %v447
      %451 = vrot.lane.b32.xlu0 %v232, 62
      %v452 = vpop.permute.xlu0 %451
      %454 = vst.msk [vmem:[#allocation2 + $0x10] sm:$0xf] %vm444, %v452
      %455 = vrot.lane.b32.xlu0 %v432, 64
      %v456 = vpop.permute.xlu0 %455
      %458 = vst.msk [vmem:[#allocation2 + $0x10] sm:$0xf0] %vm449, %v456
      %459 = vrot.lane.b32.xlu0 %v236, 63
      %v460 = vpop.permute.xlu0 %459
      %462 = vst.msk [vmem:[#allocation2 + $0x20] sm:$0xf] %vm444, %v460
      %463 = vrot.lane.b32.xlu0 %v432, 62
      %v464 = vpop.permute.xlu0 %463
      %466 = vst.msk [vmem:[#allocation2 + $0x20] sm:$0xf0] %vm449, %v464
      %468 = vrot.lane.b32.xlu0 %v240, 64
      %v469 = vpop.permute.xlu0 %468
      %471 = vst.msk [vmem:[#allocation2 + $0x30] sm:$0xf] %vm444, %v469
      %v472 = vrot.slane %v240, 4
      %473 = vrot.lane.b32.xlu0 %v472, 63
      %v474 = vpop.permute.xlu0 %473
      %476 = vst.msk [vmem:[#allocation2 + $0x30] sm:$0xf0] %vm449, %v474
      %477 = vrot.lane.b32.xlu0 %v240, 62
      %v478 = vpop.permute.xlu0 %477
      %480 = vst.msk [vmem:[#allocation2 + $0x40] sm:$0xf] %vm444, %v478
      %481 = vrot.lane.b32.xlu0 %v236, 80
      %v482 = vpop.permute.xlu0 %481
      %vm484 = vcmask 781952
      %485 = vst.msk [vmem:[#allocation2] sm:$0xf] %vm484, %v482
      %486 = vrot.lane.b32.xlu0 %v432, 79
      %v487 = vpop.permute.xlu0 %486
      %vm489 = vcmask 786052
      %490 = vst.msk [vmem:[#allocation2] sm:$0xf0] %vm489, %v487
      %491 = vrot.lane.b32.xlu0 %v236, 78
      %v492 = vpop.permute.xlu0 %491
      %494 = vst.msk [vmem:[#allocation2 + $0x10] sm:$0xf] %vm484, %v492
      %495 = vrot.lane.b32.xlu0 %v472, 80
      %v496 = vpop.permute.xlu0 %495
      %498 = vst.msk [vmem:[#allocation2 + $0x10] sm:$0xf0] %vm489, %v496
      %499 = vrot.lane.b32.xlu0 %v240, 79
      %v500 = vpop.permute.xlu0 %499
      %502 = vst.msk [vmem:[#allocation2 + $0x20] sm:$0xf] %vm484, %v500
      %503 = vrot.lane.b32.xlu0 %v472, 78
      %v504 = vpop.permute.xlu0 %503
      %506 = vst.msk [vmem:[#allocation2 + $0x20] sm:$0xf0] %vm489, %v504
      %508 = vrot.lane.b32.xlu0 %v244, 80
      %v509 = vpop.permute.xlu0 %508
      %511 = vst.msk [vmem:[#allocation2 + $0x30] sm:$0xf] %vm484, %v509
      %v512 = vrot.slane %v244, 4
      %513 = vrot.lane.b32.xlu0 %v512, 79
      %v514 = vpop.permute.xlu0 %513
      %516 = vst.msk [vmem:[#allocation2 + $0x30] sm:$0xf0] %vm489, %v514
      %517 = vrot.lane.b32.xlu0 %v244, 78
      %v518 = vpop.permute.xlu0 %517
      %520 = vst.msk [vmem:[#allocation2 + $0x40] sm:$0xf] %vm484, %v518
      %521 = vrot.lane.b32.xlu0 %v240, 96
      %v522 = vpop.permute.xlu0 %521
      %vm524 = vcmask 913152
      %525 = vst.msk [vmem:[#allocation2] sm:$0xf] %vm524, %v522
      %526 = vrot.lane.b32.xlu0 %v472, 95
      %v527 = vpop.permute.xlu0 %526
      %vm529 = vcmask 917252
      %530 = vst.msk [vmem:[#allocation2] sm:$0xf0] %vm529, %v527
      %531 = vrot.lane.b32.xlu0 %v240, 94
      %v532 = vpop.permute.xlu0 %531
      %534 = vst.msk [vmem:[#allocation2 + $0x10] sm:$0xf] %vm524, %v532
      %535 = vrot.lane.b32.xlu0 %v512, 96
      %v536 = vpop.permute.xlu0 %535
      %538 = vst.msk [vmem:[#allocation2 + $0x10] sm:$0xf0] %vm529, %v536
      %539 = vrot.lane.b32.xlu0 %v244, 95
      %v540 = vpop.permute.xlu0 %539
      %542 = vst.msk [vmem:[#allocation2 + $0x20] sm:$0xf] %vm524, %v540
      %543 = vrot.lane.b32.xlu0 %v512, 94
      %v544 = vpop.permute.xlu0 %543
      %546 = vst.msk [vmem:[#allocation2 + $0x20] sm:$0xf0] %vm529, %v544
      %548 = vrot.lane.b32.xlu0 %v248, 96
      %v549 = vpop.permute.xlu0 %548
      %551 = vst.msk [vmem:[#allocation2 + $0x30] sm:$0xf] %vm524, %v549
      %v552 = vrot.slane %v248, 4
      %553 = vrot.lane.b32.xlu0 %v552, 95
      %v554 = vpop.permute.xlu0 %553
      %556 = vst.msk [vmem:[#allocation2 + $0x30] sm:$0xf0] %vm529, %v554
      %557 = vrot.lane.b32.xlu0 %v248, 94
      %v558 = vpop.permute.xlu0 %557
      %560 = vst.msk [vmem:[#allocation2 + $0x40] sm:$0xf] %vm524, %v558
      %561 = vrot.lane.b32.xlu0 %v244, 112
      %v562 = vpop.permute.xlu0 %561
      %vm564 = vcmask 1044352
      %565 = vst.msk [vmem:[#allocation2] sm:$0xf] %vm564, %v562
      %566 = vrot.lane.b32.xlu0 %v512, 111
      %v567 = vpop.permute.xlu0 %566
      %vm569 = vcmask 1048452
      %570 = vst.msk [vmem:[#allocation2] sm:$0xf0] %vm569, %v567
      %571 = vrot.lane.b32.xlu0 %v244, 110
      %v572 = vpop.permute.xlu0 %571
      %574 = vst.msk [vmem:[#allocation2 + $0x10] sm:$0xf] %vm564, %v572
      %575 = vrot.lane.b32.xlu0 %v552, 112
      %v576 = vpop.permute.xlu0 %575
      %578 = vst.msk [vmem:[#allocation2 + $0x10] sm:$0xf0] %vm569, %v576
      %579 = vrot.lane.b32.xlu0 %v248, 111
      %v580 = vpop.permute.xlu0 %579
      %582 = vst.msk [vmem:[#allocation2 + $0x20] sm:$0xf] %vm564, %v580
      %583 = vrot.lane.b32.xlu0 %v552, 110
      %v584 = vpop.permute.xlu0 %583
      %586 = vst.msk [vmem:[#allocation2 + $0x20] sm:$0xf0] %vm569, %v584
      %588 = vrot.lane.b32.xlu0 %v252, 112
      %v589 = vpop.permute.xlu0 %588
      %591 = vst.msk [vmem:[#allocation2 + $0x30] sm:$0xf] %vm564, %v589
      %v592 = vrot.slane %v252, 4
      %593 = vrot.lane.b32.xlu0 %v592, 111
      %v594 = vpop.permute.xlu0 %593
      %596 = vst.msk [vmem:[#allocation2 + $0x30] sm:$0xf0] %vm569, %v594
      %597 = vrot.lane.b32.xlu0 %v252, 110
      %v598 = vpop.permute.xlu0 %597
      %600 = vst.msk [vmem:[#allocation2 + $0x40] sm:$0xf] %vm564, %v598
      %601 = vst.msk [vmem:[#allocation2 + $0x8] sm:$0xf] %vm285, %v248
      %602 = vrot.lane.b32.xlu0 %v552, 127
      %v603 = vpop.permute.xlu0 %602
      %605 = vst.msk [vmem:[#allocation2 + $0x8] sm:$0xf0] %vm292, %v603
      %606 = vrot.lane.b32.xlu0 %v248, 126
      %v607 = vpop.permute.xlu0 %606
      %609 = vst.msk [vmem:[#allocation2 + $0x18] sm:$0xf] %vm285, %v607
      %611 = vst.msk [vmem:[#allocation2 + $0x18] sm:$0xf0] %vm292, %v592
      %612 = vrot.lane.b32.xlu0 %v252, 127
      %v613 = vpop.permute.xlu0 %612
      %615 = vst.msk [vmem:[#allocation2 + $0x28] sm:$0xf] %vm285, %v613
      %616 = vrot.lane.b32.xlu0 %v592, 126
      %v617 = vpop.permute.xlu0 %616
      %619 = vst.msk [vmem:[#allocation2 + $0x28] sm:$0xf0] %vm292, %v617
      %620 = vst.msk [vmem:[#allocation2 + $0x38] sm:$0xf] %vm285, %v256
      %v622 = vrot.slane %v256, 4
      %623 = vrot.lane.b32.xlu0 %v622, 127
      %v624 = vpop.permute.xlu0 %623
      %626 = vst.msk [vmem:[#allocation2 + $0x38] sm:$0xf0] %vm292, %v624
      %627 = vrot.lane.b32.xlu0 %v256, 126
      %v628 = vpop.permute.xlu0 %627
      %630 = vst.msk [vmem:[#allocation2 + $0x48] sm:$0xf] %vm285, %v628
      %631 = vrot.lane.b32.xlu0 %v252, 16
      %v632 = vpop.permute.xlu0 %631
      %634 = vst.msk [vmem:[#allocation2 + $0x8] sm:$0xf] %vm324, %v632
      %635 = vrot.lane.b32.xlu0 %v592, 15
      %v636 = vpop.permute.xlu0 %635
      %638 = vst.msk [vmem:[#allocation2 + $0x8] sm:$0xf0] %vm329, %v636
      %639 = vrot.lane.b32.xlu0 %v252, 14
      %v640 = vpop.permute.xlu0 %639
      %642 = vst.msk [vmem:[#allocation2 + $0x18] sm:$0xf] %vm324, %v640
      %643 = vrot.lane.b32.xlu0 %v622, 16
      %v644 = vpop.permute.xlu0 %643
      %646 = vst.msk [vmem:[#allocation2 + $0x18] sm:$0xf0] %vm329, %v644
      %647 = vrot.lane.b32.xlu0 %v256, 15
      %v648 = vpop.permute.xlu0 %647
      %650 = vst.msk [vmem:[#allocation2 + $0x28] sm:$0xf] %vm324, %v648
      %651 = vrot.lane.b32.xlu0 %v622, 14
      %v652 = vpop.permute.xlu0 %651
      %654 = vst.msk [vmem:[#allocation2 + $0x28] sm:$0xf0] %vm329, %v652
      %656 = vrot.lane.b32.xlu0 %v260, 16
      %v657 = vpop.permute.xlu0 %656
      %659 = vst.msk [vmem:[#allocation2 + $0x38] sm:$0xf] %vm324, %v657
      %v660 = vrot.slane %v260, 4
      %661 = vrot.lane.b32.xlu0 %v660, 15
      %v662 = vpop.permute.xlu0 %661
      %664 = vst.msk [vmem:[#allocation2 + $0x38] sm:$0xf0] %vm329, %v662
      %665 = vrot.lane.b32.xlu0 %v260, 14
      %v666 = vpop.permute.xlu0 %665
      %668 = vst.msk [vmem:[#allocation2 + $0x48] sm:$0xf] %vm324, %v666
      %669 = vrot.lane.b32.xlu0 %v256, 32
      %v670 = vpop.permute.xlu0 %669
      %672 = vst.msk [vmem:[#allocation2 + $0x8] sm:$0xf] %vm364, %v670
      %673 = vrot.lane.b32.xlu0 %v622, 31
      %v674 = vpop.permute.xlu0 %673
      %676 = vst.msk [vmem:[#allocation2 + $0x8] sm:$0xf0] %vm369, %v674
      %677 = vrot.lane.b32.xlu0 %v256, 30
      %v678 = vpop.permute.xlu0 %677
      %680 = vst.msk [vmem:[#allocation2 + $0x18] sm:$0xf] %vm364, %v678
      %681 = vrot.lane.b32.xlu0 %v660, 32
      %v682 = vpop.permute.xlu0 %681
      %684 = vst.msk [vmem:[#allocation2 + $0x18] sm:$0xf0] %vm369, %v682
      %685 = vrot.lane.b32.xlu0 %v260, 31
      %v686 = vpop.permute.xlu0 %685
      %688 = vst.msk [vmem:[#allocation2 + $0x28] sm:$0xf] %vm364, %v686
      %689 = vrot.lane.b32.xlu0 %v660, 30
      %v690 = vpop.permute.xlu0 %689
      %692 = vst.msk [vmem:[#allocation2 + $0x28] sm:$0xf0] %vm369, %v690
      %694 = vrot.lane.b32.xlu0 %v264, 32
      %v695 = vpop.permute.xlu0 %694
      %697 = vst.msk [vmem:[#allocation2 + $0x38] sm:$0xf] %vm364, %v695
      %v698 = vrot.slane %v264, 4
      %699 = vrot.lane.b32.xlu0 %v698, 31
      %v700 = vpop.permute.xlu0 %699
      %702 = vst.msk [vmem:[#allocation2 + $0x38] sm:$0xf0] %vm369, %v700
      %703 = vrot.lane.b32.xlu0 %v264, 30
      %v704 = vpop.permute.xlu0 %703
      %706 = vst.msk [vmem:[#allocation2 + $0x48] sm:$0xf] %vm364, %v704
      %707 = vrot.lane.b32.xlu0 %v260, 48
      %v708 = vpop.permute.xlu0 %707
      %710 = vst.msk [vmem:[#allocation2 + $0x8] sm:$0xf] %vm404, %v708
      %711 = vrot.lane.b32.xlu0 %v660, 47
      %v712 = vpop.permute.xlu0 %711
      %714 = vst.msk [vmem:[#allocation2 + $0x8] sm:$0xf0] %vm409, %v712
      %715 = vrot.lane.b32.xlu0 %v260, 46
      %v716 = vpop.permute.xlu0 %715
      %718 = vst.msk [vmem:[#allocation2 + $0x18] sm:$0xf] %vm404, %v716
      %719 = vrot.lane.b32.xlu0 %v698, 48
      %v720 = vpop.permute.xlu0 %719
      %722 = vst.msk [vmem:[#allocation2 + $0x18] sm:$0xf0] %vm409, %v720
      %723 = vrot.lane.b32.xlu0 %v264, 47
      %v724 = vpop.permute.xlu0 %723
      %726 = vst.msk [vmem:[#allocation2 + $0x28] sm:$0xf] %vm404, %v724
      %727 = vrot.lane.b32.xlu0 %v698, 46
      %v728 = vpop.permute.xlu0 %727
      %730 = vst.msk [vmem:[#allocation2 + $0x28] sm:$0xf0] %vm409, %v728
      %732 = vrot.lane.b32.xlu0 %v268, 48
      %v733 = vpop.permute.xlu0 %732
      %735 = vst.msk [vmem:[#allocation2 + $0x38] sm:$0xf] %vm404, %v733
      %v736 = vrot.slane %v268, 4
      %737 = vrot.lane.b32.xlu0 %v736, 47
      %v738 = vpop.permute.xlu0 %737
      %740 = vst.msk [vmem:[#allocation2 + $0x38] sm:$0xf0] %vm409, %v738
      %741 = vrot.lane.b32.xlu0 %v268, 46
      %v742 = vpop.permute.xlu0 %741
      %744 = vst.msk [vmem:[#allocation2 + $0x48] sm:$0xf] %vm404, %v742
      %745 = vrot.lane.b32.xlu0 %v264, 64
      %v746 = vpop.permute.xlu0 %745
      %748 = vst.msk [vmem:[#allocation2 + $0x8] sm:$0xf] %vm444, %v746
      %749 = vrot.lane.b32.xlu0 %v698, 63
      %v750 = vpop.permute.xlu0 %749
      %752 = vst.msk [vmem:[#allocation2 + $0x8] sm:$0xf0] %vm449, %v750
      %753 = vrot.lane.b32.xlu0 %v264, 62
      %v754 = vpop.permute.xlu0 %753
      %756 = vst.msk [vmem:[#allocation2 + $0x18] sm:$0xf] %vm444, %v754
      %757 = vrot.lane.b32.xlu0 %v736, 64
      %v758 = vpop.permute.xlu0 %757
      %760 = vst.msk [vmem:[#allocation2 + $0x18] sm:$0xf0] %vm449, %v758
      %761 = vrot.lane.b32.xlu0 %v268, 63
      %v762 = vpop.permute.xlu0 %761
      %764 = vst.msk [vmem:[#allocation2 + $0x28] sm:$0xf] %vm444, %v762
      %765 = vrot.lane.b32.xlu0 %v736, 62
      %v766 = vpop.permute.xlu0 %765
      %768 = vst.msk [vmem:[#allocation2 + $0x28] sm:$0xf0] %vm449, %v766
      %770 = vrot.lane.b32.xlu0 %v272, 64
      %v771 = vpop.permute.xlu0 %770
      %773 = vst.msk [vmem:[#allocation2 + $0x38] sm:$0xf] %vm444, %v771
      %v774 = vrot.slane %v272, 4
      %775 = vrot.lane.b32.xlu0 %v774, 63
      %v776 = vpop.permute.xlu0 %775
      %778 = vst.msk [vmem:[#allocation2 + $0x38] sm:$0xf0] %vm449, %v776
      %779 = vrot.lane.b32.xlu0 %v272, 62
      %v780 = vpop.permute.xlu0 %779
      %782 = vst.msk [vmem:[#allocation2 + $0x48] sm:$0xf] %vm444, %v780
      %783 = vrot.lane.b32.xlu0 %v268, 80
      %v784 = vpop.permute.xlu0 %783
      %786 = vst.msk [vmem:[#allocation2 + $0x8] sm:$0xf] %vm484, %v784
      %787 = vrot.lane.b32.xlu0 %v736, 79
      %v788 = vpop.permute.xlu0 %787
      %790 = vst.msk [vmem:[#allocation2 + $0x8] sm:$0xf0] %vm489, %v788
      %791 = vrot.lane.b32.xlu0 %v268, 78
      %v792 = vpop.permute.xlu0 %791
      %794 = vst.msk [vmem:[#allocation2 + $0x18] sm:$0xf] %vm484, %v792
      %795 = vrot.lane.b32.xlu0 %v774, 80
      %v796 = vpop.permute.xlu0 %795
      %798 = vst.msk [vmem:[#allocation2 + $0x18] sm:$0xf0] %vm489, %v796
      %799 = vrot.lane.b32.xlu0 %v272, 79
      %v800 = vpop.permute.xlu0 %799
      %802 = vst.msk [vmem:[#allocation2 + $0x28] sm:$0xf] %vm484, %v800
      %803 = vrot.lane.b32.xlu0 %v774, 78
      %v804 = vpop.permute.xlu0 %803
      %806 = vst.msk [vmem:[#allocation2 + $0x28] sm:$0xf0] %vm489, %v804
      %808 = vrot.lane.b32.xlu0 %v276, 80
      %v809 = vpop.permute.xlu0 %808
      %811 = vst.msk [vmem:[#allocation2 + $0x38] sm:$0xf] %vm484, %v809
      %v812 = vrot.slane %v276, 4
      %813 = vrot.lane.b32.xlu0 %v812, 79
      %v814 = vpop.permute.xlu0 %813
      %816 = vst.msk [vmem:[#allocation2 + $0x38] sm:$0xf0] %vm489, %v814
      %817 = vrot.lane.b32.xlu0 %v276, 78
      %v818 = vpop.permute.xlu0 %817
      %820 = vst.msk [vmem:[#allocation2 + $0x48] sm:$0xf] %vm484, %v818
      %821 = vrot.lane.b32.xlu0 %v272, 96
      %v822 = vpop.permute.xlu0 %821
      %824 = vst.msk [vmem:[#allocation2 + $0x8] sm:$0xf] %vm524, %v822
      %825 = vrot.lane.b32.xlu0 %v774, 95
      %v826 = vpop.permute.xlu0 %825
      %828 = vst.msk [vmem:[#allocation2 + $0x8] sm:$0xf0] %vm529, %v826
      %829 = vrot.lane.b32.xlu0 %v272, 94
      %v830 = vpop.permute.xlu0 %829
      %832 = vst.msk [vmem:[#allocation2 + $0x18] sm:$0xf] %vm524, %v830
      %833 = vrot.lane.b32.xlu0 %v812, 96
      %v834 = vpop.permute.xlu0 %833
      %836 = vst.msk [vmem:[#allocation2 + $0x18] sm:$0xf0] %vm529, %v834
      %837 = vrot.lane.b32.xlu0 %v276, 95
      %v838 = vpop.permute.xlu0 %837
      %840 = vst.msk [vmem:[#allocation2 + $0x28] sm:$0xf] %vm524, %v838
      %841 = vrot.lane.b32.xlu0 %v812, 94
      %v842 = vpop.permute.xlu0 %841
      %844 = vst.msk [vmem:[#allocation2 + $0x28] sm:$0xf0] %vm529, %v842
      %846 = vrot.lane.b32.xlu0 %v280, 96
      %v847 = vpop.permute.xlu0 %846
      %849 = vst.msk [vmem:[#allocation2 + $0x38] sm:$0xf] %vm524, %v847
      %v850 = vrot.slane %v280, 4
      %851 = vrot.lane.b32.xlu0 %v850, 95
      %v852 = vpop.permute.xlu0 %851
      %854 = vst.msk [vmem:[#allocation2 + $0x38] sm:$0xf0] %vm529, %v852
      %855 = vrot.lane.b32.xlu0 %v280, 94
      %v856 = vpop.permute.xlu0 %855
      %858 = vst.msk [vmem:[#allocation2 + $0x48] sm:$0xf] %vm524, %v856
      %859 = vrot.lane.b32.xlu0 %v276, 112
      %v860 = vpop.permute.xlu0 %859
      %862 = vst.msk [vmem:[#allocation2 + $0x8] sm:$0xf] %vm564, %v860
      %863 = vrot.lane.b32.xlu0 %v812, 111
      %v864 = vpop.permute.xlu0 %863
      %866 = vst.msk [vmem:[#allocation2 + $0x8] sm:$0xf0] %vm569, %v864
      %867 = vrot.lane.b32.xlu0 %v276, 110
      %v868 = vpop.permute.xlu0 %867
      %870 = vst.msk [vmem:[#allocation2 + $0x18] sm:$0xf] %vm564, %v868
      %871 = vrot.lane.b32.xlu0 %v850, 112
      %v872 = vpop.permute.xlu0 %871
      %874 = vst.msk [vmem:[#allocation2 + $0x18] sm:$0xf0] %vm569, %v872
      %875 = vrot.lane.b32.xlu0 %v280, 111
      %v876 = vpop.permute.xlu0 %875
      %878 = vst.msk [vmem:[#allocation2 + $0x28] sm:$0xf] %vm564, %v876
      %879 = vrot.lane.b32.xlu0 %v850, 110
      %v880 = vpop.permute.xlu0 %879
      %882 = vst.msk [vmem:[#allocation2 + $0x28] sm:$0xf0] %vm569, %v880
      %884 = vrot.lane.b32.xlu0 %v284, 112
      %v885 = vpop.permute.xlu0 %884
      %887 = vst.msk [vmem:[#allocation2 + $0x38] sm:$0xf] %vm564, %v885
      %v888 = vrot.slane %v284, 4
      %889 = vrot.lane.b32.xlu0 %v888, 111
      %v890 = vpop.permute.xlu0 %889
      %892 = vst.msk [vmem:[#allocation2 + $0x38] sm:$0xf0] %vm569, %v890
      %893 = vrot.lane.b32.xlu0 %v284, 110
      %v894 = vpop.permute.xlu0 %893
      %896 = vst.msk [vmem:[#allocation2 + $0x48] sm:$0xf] %vm564, %v894
      %v897 = vld [vmem:[%s1] sm:$0xff]
      %v898 = vld [vmem:[#allocation2] sm:$0xff]
      %v899 = vld [vmem:[#allocation2 + $0x8] sm:$0xff]
      %v900 = vld [vmem:[#allocation2 + $0x10] sm:$0xff]
      %v901 = vld [vmem:[#allocation2 + $0x18] sm:$0xff]
      %v902 = vld [vmem:[#allocation2 + $0x20] sm:$0xff]
      %v903 = vld [vmem:[#allocation2 + $0x28] sm:$0xff]
      %v904 = vld [vmem:[#allocation2 + $0x30] sm:$0xff]
      %v905 = vld [vmem:[#allocation2 + $0x38] sm:$0xff]
      %v906 = vld [vmem:[#allocation2 + $0x40] sm:$0xf]
      %v907 = vld [vmem:[#allocation2 + $0x48] sm:$0xf]
      %vm908 = vcmask 293888
      %v910 = vsel %vm908, %v897, 0
      %vm912 = vcmask 1043456
      %v914 = vsel %vm912, %v906, 0
      %v917 = vsel %vm912, %v907, 0
      %919 = vmatprep.subr.mxu0 0.0
      %920 = vmatpush1.msra.mxu0 0.0
      %921 = vmatprep.subr.mxu0 0.0
      %922 = vmatpush1.msra.mxu0 0.0
      %923 = vmatprep.subr.mxu0 0.0
      %924 = vmatpush1.msra.mxu0 0.0
      %925 = vmatprep.subr.mxu0 0.0
      %926 = vmatpush1.msra.mxu0 0.0
      %927 = vmatprep.subr.mxu0 0.0
      %928 = vmatpush1.msra.mxu0 0.0
      %929 = vmatprep.subr.mxu0 0.0
      %930 = vmatpush1.msra.mxu0 0.0
      %931 = vmatprep.subr.mxu0 0.0
      %932 = vmatpush1.msra.mxu0 0.0
      %933 = vmatprep.subr.mxu0 0.0
      %934 = vmatpush1.msra.mxu0 0.0
      %935 = vmatprep.subr.mxu0 0.0
      %936 = vmatpush1.msra.mxu0 0.0
      %937 = vmatprep.subr.mxu0 0.0
      %938 = vmatpush1.msra.mxu0 0.0
      %939 = vmatprep.subr.mxu0 0.0
      %940 = vmatpush1.msra.mxu0 0.0
      %941 = vmatprep.subr.mxu0 %v917
      %942 = vmatpush1.msra.mxu0 %v914
      %943 = vmatprep.subr.mxu0 %v905
      %944 = vmatpush1.msra.mxu0 %v904
      %945 = vmatprep.subr.mxu0 %v903
      %946 = vmatpush1.msra.mxu0 %v902
      %947 = vmatprep.subr.mxu0 %v901
      %948 = vmatpush1.msra.mxu0 %v900
      %949 = vmatprep.subr.mxu0 %v899
      %950 = vmatpush1.msra.mxu0 %v898
      %951 = vmatprep.subr.mxu0 0.0
      %952 = vmatpush2.msra.mxu0 0.0
      %953 = vmatprep.subr.mxu0 0.0
      %954 = vmatpush2.msra.mxu0 0.0
      %955 = vmatprep.subr.mxu0 0.0
      %956 = vmatpush2.msra.mxu0 0.0
      %957 = vmatprep.subr.mxu0 0.0
      %958 = vmatpush2.msra.mxu0 0.0
      %959 = vmatprep.subr.mxu0 0.0
      %960 = vmatpush2.msra.mxu0 0.0
      %961 = vmatprep.subr.mxu0 0.0
      %962 = vmatpush2.msra.mxu0 0.0
      %963 = vmatprep.subr.mxu0 0.0
      %964 = vmatpush2.msra.mxu0 0.0
      %965 = vmatprep.subr.mxu0 0.0
      %966 = vmatpush2.msra.mxu0 0.0
      %967 = vmatprep.subr.mxu0 0.0
      %968 = vmatpush2.msra.mxu0 0.0
      %969 = vmatprep.subr.mxu0 0.0
      %970 = vmatpush2.msra.mxu0 0.0
      %971 = vmatprep.subr.mxu0 0.0
      %972 = vmatpush2.msra.mxu0 0.0
      %973 = vmatprep.subr.mxu0 0.0
      %974 = vmatpush2.msra.mxu0 0.0
      %975 = vmatprep.subr.mxu0 0.0
      %976 = vmatpush2.msra.mxu0 0.0
      %977 = vmatprep.subr.mxu0 0.0
      %978 = vmatpush2.msra.mxu0 0.0
      %979 = vmatprep.subr.mxu0 0.0
      %980 = vmatpush2.msra.mxu0 0.0
      %981 = vmatprep.subr.mxu0 0.0
      %982 = vmatpush2.msra.mxu0 0.0
      %983 = vmatprep.mubr.f32.mxu0 0.0
      %984 = vmatmul.mubr.f32.gmra.mxu0 %v910
      %v985 = vpop.f32.mrf.mxu0
      %v986 = vadd.f32 0.0, %v985
      %v987 = vpop.f32.mrf.mxu0
      %v988 = vadd.f32 0.0, %v987
      %989 = vdwg.mxu0
      %990 = vst [vmem:[%s204] sm:$0xff] %v986
      %991 = vst [vmem:[%s204 + $0x8] sm:$0xff] %v988
      %v992 = vadd.f32 %v986, %v988
      %993 = vadd.xlane.f32.xlu0 %v992
      %v994 = vpop.xlane.xlu0 %993
      %vm995 = vcmask 7168
      %996 = vst.msk [vmem:[%s212] sm:$0xff] %vm995, %v994
      %v997 = vmul.f32 %v986, %v986
      %v998 = vmul.f32 %v988, %v988
      %v999 = vadd.f32 %v997, %v998
      %1000 = vadd.xlane.f32.xlu0 %v999
      %v1001 = vpop.xlane.xlu0 %1000
      %vm1002 = vcmask 15368
      %1003 = vst.msk [vmem:[%s212] sm:$0xff] %vm1002, %v1001
      %s1004 = smul.u32 2, %s20
      %p1005 = scmp.lt.s32.totalorder %s19, 1
      %s1006 = scalar_select %p1005, %s19, 1
      %p1007 = scmp.lt.s32.totalorder %s1004, 1
      %s1008 = scalar_select %p1007, %s1004, 1
      %s1009 = smul.addr %s1006, 2
      %s1010 = sadd.s32 %s1008, %s1009
      %s1011 = smul.addr %s1010, 8
      %s1012 = scalar_lea.vmem %s2, %s1011
      %p1013 = scmp.lt.s32.totalorder %s19, 1
      %s1014 = scalar_select %p1013, %s19, 1
      %p1015 = scmp.lt.s32.totalorder %s20, 0
      %s1016 = scalar_select %p1015, %s20, 0
      %s1017 = sadd.s32 %s1016, %s1014
      %s1018 = smul.addr %s1017, 8
      %s1019 = scalar_lea.vmem %s3, %s1018
      // Predicated region
      $region29: #{convolution_forward.2} parent=27 // pred_check
        %p1020 = pneg %p94
      $region30: #{convolution_forward.2} parent=27 // pred_check_branch
        %1022 = sbr.rel (%p1020) target = $region32
      $region31: #{convolution_forward.2} parent=27 // pred_region
        %s1023 = smul.u32 2, %s20
      $region32: #{convolution_forward.2} parent=27 // pred_fallthru
        _
      // Predicated region
      $region33: #{convolution_forward.2} parent=27 // pred_check
        %p1024 = pneg %p122
      $region34: #{convolution_forward.2} parent=27 // pred_check_branch
        %1026 = sbr.rel (%p1024) target = $region36
      $region35: #{convolution_forward.2} parent=27 // pred_region
        _
      $region36: #{convolution_forward.2} parent=27 // pred_fallthru
        _
    $region28: #{convolution_forward.2} parent=5 // pred_fallthru
      _
    %p1027 = scmp.le.s32.totalorder 2, %s10
    // Predicated region
    $region37: #{convolution_forward.2} parent=5 // pred_check
      %p1028 = pneg %p1027
    $region38: #{convolution_forward.2} parent=5 // pred_check_branch
      %1030 = sbr.rel (%p1028) target = $region40
    $region39: #{convolution_forward.2} parent=5 // pred_region
      %s1031 = ssub.s32 %s10, 2
      // Predicated region
      $region41: #{convolution_forward.2} parent=39 // pred_check
        %p1032 = pneg %p100
      $region42: #{convolution_forward.2} parent=39 // pred_check_branch
        %1034 = sbr.rel (%p1032) target = $region44
      $region43: #{convolution_forward.2} parent=39 // pred_region
        %s1035 = smul.u32 2, %s22
        %p1036 = scmp.lt.s32.totalorder %s21, 1
        %s1037 = scalar_select %p1036, %s21, 1
        %p1038 = scmp.lt.s32.totalorder %s1035, 1
        %s1039 = scalar_select %p1038, %s1035, 1
        %s1040 = smul.addr %s1037, 2
        %s1041 = sadd.s32 %s1039, %s1040
        %s1042 = smul.addr %s1041, 8
        %s1043 = scalar_lea.vmem %s2, %s1042
      $region44: #{convolution_forward.2} parent=39 // pred_fallthru
        _
      // Predicated region
      $region45: #{convolution_forward.2} parent=39 // pred_check
        %p1044 = pneg %p128
      $region46: #{convolution_forward.2} parent=39 // pred_check_branch
        %1046 = sbr.rel (%p1044) target = $region48
      $region47: #{convolution_forward.2} parent=39 // pred_region
        %p1047 = scmp.lt.s32.totalorder %s21, 1
        %s1048 = scalar_select %p1047, %s21, 1
        %p1049 = scmp.lt.s32.totalorder %s22, 0
        %s1050 = scalar_select %p1049, %s22, 0
        %s1051 = sadd.s32 %s1050, %s1048
        %s1052 = smul.addr %s1051, 8
        %s1053 = scalar_lea.vmem %s3, %s1052
      $region48: #{convolution_forward.2} parent=39 // pred_fallthru
        _
    $region40: #{convolution_forward.2} parent=5 // pred_fallthru
      _
  $region6: #{convolution_forward.2} parent=0 // loop_footer
    %s14 = sadd.s32 1, %s10
  $region7: #{convolution_forward.2} parent=0 // loop_footer_branch
    %9 = sbr.rel target = $region3
  $region8: #{convolution_forward.2} parent=0 // loop_exit
    _

</llo_original>
